<compile_context>
chip_gen: v7x
topology: tpu7x:2x2x1
jax: 0.10.0
libtpu: 0.0.40
codegen_flags: <defaults>
</compile_context>

<pallas_src>
import jax
import jax.numpy as jnp
from jax.experimental import pallas as pl
from jax.experimental.pallas import tpu as pltpu

# ----- problem sizes (small, consistent with the module) -----
BATCH = 2
SEQ = 8            # N tokens
DIM = 32           # C
NUM_HEADS = 4
HEAD_DIM = DIM // NUM_HEADS
MLP_HIDDEN = int(DIM * 4.0)   # 128
EPS = 1e-5
SCALE = HEAD_DIM ** -0.5

# rows of the packed small-parameter slab (8 sublanes x 128 lanes, f32)
ROW_LN1_W, ROW_LN1_B, ROW_BPROJ, ROW_LN2_W, ROW_LN2_B, ROW_B1, ROW_B2 = range(7)
VEC_ROWS, VEC_COLS = 8, 128
assert MLP_HIDDEN <= VEC_COLS


# ---------- in-kernel helpers (VPU / EUP work, kept in f32) ----------
def _layernorm(x, w, b):
    mu = jnp.mean(x, axis=-1, keepdims=True)
    var = jnp.mean((x - mu) ** 2, axis=-1, keepdims=True)
    return (x - mu) * jax.lax.rsqrt(var + EPS) * w + b


def _erf(x):
    # Abramowitz & Stegun 7.1.26 polynomial; max abs error ~1.5e-7 (exact reciprocal).
    a1, a2, a3, a4, a5 = 0.254829592, -0.284496736, 1.421413741, -1.453152027, 1.061405429
    p = 0.3275911
    sgn = jnp.where(x >= 0.0, 1.0, -1.0)
    ax = jnp.abs(x)
    t = 1.0 / (1.0 + p * ax)
    poly = ((((a5 * t + a4) * t + a3) * t + a2) * t + a1) * t
    return sgn * (1.0 - poly * jnp.exp(-ax * ax))


def _gelu_exact(x):
    # torch.nn.GELU default (exact, erf-based)
    return 0.5 * x * (1.0 + _erf(x * (2.0 ** -0.5)))


# ---------- the Pallas kernel: the whole block in one invocation ----------
def block_kernel(x_ref,        # (B*N, C)   f32
                 vec_ref,      # (8, 128)   f32  packed ln/bias vectors
                 wqkv_ref,     # (C, 3C)    bf16 (attention scale folded into q cols)
                 wproj_ref,    # (C, C)     bf16
                 w1_ref,       # (C, HID)   bf16
                 w2_ref,       # (HID, C)   bf16
                 out_ref):     # (B*N, C)   f32
    x = x_ref[...]                                            # (B*N, C) f32
    vecs = vec_ref[...]                                       # (8, 128) f32

    ln1_w = vecs[ROW_LN1_W:ROW_LN1_W + 1, :DIM]
    ln1_b = vecs[ROW_LN1_B:ROW_LN1_B + 1, :DIM]
    bproj = vecs[ROW_BPROJ:ROW_BPROJ + 1, :DIM]
    ln2_w = vecs[ROW_LN2_W:ROW_LN2_W + 1, :DIM]
    ln2_b = vecs[ROW_LN2_B:ROW_LN2_B + 1, :DIM]
    b1 = vecs[ROW_B1:ROW_B1 + 1, :]                           # (1, HID)
    b2 = vecs[ROW_B2:ROW_B2 + 1, :DIM]

    # ----- norm1 + attention -----
    xn = _layernorm(x, ln1_w, ln1_b)                          # f32

    # qkv projection: bf16 operands, f32 accumulate (qkv_bias=False).
    qkv = jnp.dot(xn.astype(jnp.bfloat16), wqkv_ref[...],
                  preferred_element_type=jnp.float32)         # (B*N, 3C) f32
    # single f32->bf16 cast, reused by every head slice
    qkv_bf = qkv.astype(jnp.bfloat16).reshape(BATCH, SEQ, 3 * DIM)

    # Per-head attention, batched over the batch dim with Mosaic-safe 3-D einsums.
    o_heads = []
    for h in range(NUM_HEADS):                                # static, unrolled (4 heads)
        q = qkv_bf[:, :, h * HEAD_DIM:(h + 1) * HEAD_DIM]
        k = qkv_bf[:, :, DIM + h * HEAD_DIM: DIM + (h + 1) * HEAD_DIM]
        v = qkv_bf[:, :, 2 * DIM + h * HEAD_DIM: 2 * DIM + (h + 1) * HEAD_DIM]

        # scores (scale already folded into the q columns of Wqkv)
        s = jnp.einsum("bnd,bmd->bnm", q, k,
                       preferred_element_type=jnp.float32)    # (B, N, N) f32
        s = s - jnp.max(s, axis=-1, keepdims=True)
        e = jnp.exp(s)
        p = e / jnp.sum(e, axis=-1, keepdims=True)            # exact softmax divide

        o_heads.append(jnp.einsum("bnm,bmd->bnd", p.astype(jnp.bfloat16), v,
                                  preferred_element_type=jnp.float32))

    # concat heads once, single full-C output projection
    o = jnp.concatenate(o_heads, axis=-1).reshape(BATCH * SEQ, DIM)
    y = jnp.dot(o.astype(jnp.bfloat16), wproj_ref[...],
                preferred_element_type=jnp.float32) + bproj
    x = x + y                                                 # residual 1

    # ----- norm2 + MLP + residual -----
    xn2 = _layernorm(x, ln2_w, ln2_b)
    h1 = jnp.dot(xn2.astype(jnp.bfloat16), w1_ref[...],
                 preferred_element_type=jnp.float32) + b1
    h1 = _gelu_exact(h1)                                      # f32 elementwise
    m = jnp.dot(h1.astype(jnp.bfloat16), w2_ref[...],
                preferred_element_type=jnp.float32) + b2

    # NOTE: (16,32) output -> sub-128-lane masked stores; negligible at 2 KiB.
    # When scaling, give the output tile a last dim that is a multiple of 128.
    out_ref[...] = x + m                                      # residual 2


# ---------- one-time weight preprocessing (hoisted out of the per-call path) ----------
def prepare_params(params):
    f32, bf16 = jnp.float32, jnp.bfloat16

    # Pre-transpose all weights to (in, out) -> no in-kernel transposes.
    # Fold the attention scale into the q output columns of Wqkv.
    wqkv_t = params["wqkv"].T.astype(f32)                     # (C, 3C)
    col_scale = jnp.concatenate(
        [jnp.full((DIM,), SCALE, f32), jnp.ones((2 * DIM,), f32)])
    wqkv_t = (wqkv_t * col_scale[None, :]).astype(bf16)
    wproj_t = params["wproj"].T.astype(bf16)                  # (C, C)
    w1_t = params["w1"].T.astype(bf16)                        # (C, HID)
    w2_t = params["w2"].T.astype(bf16)                        # (HID, C)

    # Pack the 7 small f32 vectors into a single (8,128) slab (one input, one DMA).
    vec = jnp.zeros((VEC_ROWS, VEC_COLS), f32)

    def put(slab, row, v):
        v = v.reshape(-1).astype(f32)
        return slab.at[row, :v.shape[0]].set(v)

    vec = put(vec, ROW_LN1_W, params["ln1_w"])
    vec = put(vec, ROW_LN1_B, params["ln1_b"])
    vec = put(vec, ROW_BPROJ, params["bproj"])
    vec = put(vec, ROW_LN2_W, params["ln2_w"])
    vec = put(vec, ROW_LN2_B, params["ln2_b"])
    vec = put(vec, ROW_B1, params["b1"])
    vec = put(vec, ROW_B2, params["b2"])

    return {"vec": vec, "wqkv": wqkv_t, "wproj": wproj_t, "w1": w1_t, "w2": w2_t}


# ---------- wrapper (per-call path: only the pallas_call + trivial reshapes) ----------
@jax.jit
def vit_block(x, prepped):
    B, N, C = x.shape
    args = (
        x.reshape(B * N, C),         # fold batch: single kernel invocation, no grid
        prepped["vec"],
        prepped["wqkv"],
        prepped["wproj"],
        prepped["w1"],
        prepped["w2"],
    )
    out = pl.pallas_call(
        block_kernel,
        out_shape=jax.ShapeDtypeStruct((B * N, C), x.dtype),
        in_specs=[pl.BlockSpec(memory_space=pltpu.MemorySpace.VMEM) for _ in args],
        out_specs=pl.BlockSpec(memory_space=pltpu.MemorySpace.VMEM),
    )(*args)
    return out.reshape(B, N, C)


# ---------- pure-JAX reference (ground-truth PyTorch semantics, f32) ----------
def reference_block(x, p):
    def ln(v, w, b):
        mu = v.mean(-1, keepdims=True)
        var = ((v - mu) ** 2).mean(-1, keepdims=True)
        return (v - mu) / jnp.sqrt(var + EPS) * w[0] + b[0]

    hp = jax.lax.Precision.HIGHEST
    B, N, C = x.shape
    xn = ln(x, p["ln1_w"], p["ln1_b"])
    qkv = jnp.einsum("bnc,dc->bnd", xn, p["wqkv"], precision=hp)
    q, k, v = jnp.split(qkv, 3, axis=-1)

    def to_heads(t):
        return t.reshape(B, N, NUM_HEADS, HEAD_DIM).transpose(0, 2, 1, 3)

    q, k, v = to_heads(q), to_heads(k), to_heads(v)
    attn = jnp.einsum("bhnd,bhmd->bhnm", q, k, precision=hp) * SCALE
    attn = jax.nn.softmax(attn, axis=-1)
    y = jnp.einsum("bhnm,bhmd->bhnd", attn, v, precision=hp)
    y = y.transpose(0, 2, 1, 3).reshape(B, N, C)
    y = jnp.einsum("bnc,dc->bnd", y, p["wproj"], precision=hp) + p["bproj"][0]
    x = x + y

    xn2 = ln(x, p["ln2_w"], p["ln2_b"])
    h = jnp.einsum("bnc,hc->bnh", xn2, p["w1"], precision=hp) + p["b1"][0]
    h = jax.nn.gelu(h, approximate=False)
    m = jnp.einsum("bnh,ch->bnc", h, p["w2"], precision=hp) + p["b2"][0]
    return x + m


def init_params(key):
    ks = jax.random.split(key, 8)
    w = lambda k, shape: (0.02 * jax.random.normal(k, shape)).astype(jnp.float32)
    return {
        "ln1_w": jnp.ones((1, DIM), jnp.float32),
        "ln1_b": jnp.zeros((1, DIM), jnp.float32),
        "wqkv": w(ks[0], (3 * DIM, DIM)),                 # nn.Linear(dim, 3*dim).weight
        "wproj": w(ks[1], (DIM, DIM)),                    # nn.Linear(dim, dim).weight
        "bproj": w(ks[2], (1, DIM)),
        "ln2_w": jnp.ones((1, DIM), jnp.float32),
        "ln2_b": jnp.zeros((1, DIM), jnp.float32),
        "w1": w(ks[3], (MLP_HIDDEN, DIM)),                # fc1.weight
        "b1": w(ks[4], (1, MLP_HIDDEN)),
        "w2": w(ks[5], (DIM, MLP_HIDDEN)),                # fc2.weight
        "b2": w(ks[6], (1, DIM)),
    }


if __name__ == "__main__":
    key = jax.random.PRNGKey(0)
    kx, kp = jax.random.split(key)
    x = jax.random.normal(kx, (BATCH, SEQ, DIM), dtype=jnp.float32)
    params = init_params(kp)

    # weight preprocessing runs ONCE, outside the per-call path
    prepped = jax.tree_util.tree_map(jax.block_until_ready, prepare_params(params))

    out = jax.block_until_ready(vit_block(x, prepped))

    ref = reference_block(x, params)
    assert out.shape == ref.shape and out.dtype == ref.dtype
    err = jnp.max(jnp.abs(out - ref))
    assert jnp.allclose(out, ref, rtol=1e-2, atol=1e-2), f"max abs err {err}"

    print("KERNEL_OK")
</pallas_src>

<mosaic_0001>
module attributes {stable_mosaic.version = 11 : i64} {
  func.func @block_kernel(%arg0: memref<16x32xf32, #tpu.memory_space<vmem>>, %arg1: memref<8x128xf32, #tpu.memory_space<vmem>>, %arg2: memref<32x96xbf16, #tpu.memory_space<vmem>>, %arg3: memref<32x32xbf16, #tpu.memory_space<vmem>>, %arg4: memref<32x128xbf16, #tpu.memory_space<vmem>>, %arg5: memref<128x32xbf16, #tpu.memory_space<vmem>>, %arg6: memref<16x32xf32, #tpu.memory_space<vmem>>) attributes {dimension_semantics = [], scalar_prefetch = 0 : i64, scratch_operands = 0 : i64, tpu.core_type = #tpu.core_type<tc>} {
    %c0 = arith.constant 0 : index
    %c0_0 = arith.constant 0 : index
    %0 = vector.load %arg0[%c0, %c0_0] : memref<16x32xf32, #tpu.memory_space<vmem>>, vector<16x32xf32>
    %c0_1 = arith.constant 0 : index
    %c0_2 = arith.constant 0 : index
    %1 = vector.load %arg1[%c0_1, %c0_2] : memref<8x128xf32, #tpu.memory_space<vmem>>, vector<8x128xf32>
    %2 = vector.extract_strided_slice %1 {offsets = [0, 0], sizes = [1, 32], strides = [1, 1]} : vector<8x128xf32> to vector<1x32xf32>
    %3 = vector.extract_strided_slice %1 {offsets = [1, 0], sizes = [1, 32], strides = [1, 1]} : vector<8x128xf32> to vector<1x32xf32>
    %4 = vector.extract_strided_slice %1 {offsets = [2, 0], sizes = [1, 32], strides = [1, 1]} : vector<8x128xf32> to vector<1x32xf32>
    %5 = vector.extract_strided_slice %1 {offsets = [3, 0], sizes = [1, 32], strides = [1, 1]} : vector<8x128xf32> to vector<1x32xf32>
    %6 = vector.extract_strided_slice %1 {offsets = [4, 0], sizes = [1, 32], strides = [1, 1]} : vector<8x128xf32> to vector<1x32xf32>
    %7 = vector.extract_strided_slice %1 {offsets = [5, 0], sizes = [1, 128], strides = [1, 1]} : vector<8x128xf32> to vector<1x128xf32>
    %8 = vector.extract_strided_slice %1 {offsets = [6, 0], sizes = [1, 32], strides = [1, 1]} : vector<8x128xf32> to vector<1x32xf32>
    %cst = arith.constant dense<0.000000e+00> : vector<16xf32>
    %9 = vector.multi_reduction <add>, %0, %cst [1] : vector<16x32xf32> to vector<16xf32>
    %10 = vector.shape_cast %9 : vector<16xf32> to vector<16x1xf32>
    %cst_3 = arith.constant 3.200000e+01 : f32
    %11 = vector.broadcast %cst_3 : f32 to vector<16x1xf32>
    %12 = arith.divf %10, %11 : vector<16x1xf32>
    %13 = vector.broadcast %12 : vector<16x1xf32> to vector<16x32xf32>
    %14 = arith.subf %0, %13 : vector<16x32xf32>
    %15 = arith.mulf %14, %14 : vector<16x32xf32>
    %cst_4 = arith.constant dense<0.000000e+00> : vector<16xf32>
    %16 = vector.multi_reduction <add>, %15, %cst_4 [1] : vector<16x32xf32> to vector<16xf32>
    %17 = vector.shape_cast %16 : vector<16xf32> to vector<16x1xf32>
    %cst_5 = arith.constant 3.200000e+01 : f32
    %18 = vector.broadcast %cst_5 : f32 to vector<16x1xf32>
    %19 = arith.divf %17, %18 : vector<16x1xf32>
    %20 = vector.broadcast %12 : vector<16x1xf32> to vector<16x32xf32>
    %21 = arith.subf %0, %20 : vector<16x32xf32>
    %cst_6 = arith.constant 9.99999974E-6 : f32
    %22 = vector.broadcast %cst_6 : f32 to vector<16x1xf32>
    %23 = arith.addf %19, %22 : vector<16x1xf32>
    %24 = math.rsqrt %23 : vector<16x1xf32>
    %25 = vector.broadcast %24 : vector<16x1xf32> to vector<16x32xf32>
    %26 = arith.mulf %21, %25 : vector<16x32xf32>
    %27 = vector.broadcast %2 : vector<1x32xf32> to vector<16x32xf32>
    %28 = arith.mulf %26, %27 : vector<16x32xf32>
    %29 = vector.broadcast %3 : vector<1x32xf32> to vector<16x32xf32>
    %30 = arith.addf %28, %29 : vector<16x32xf32>
    %31 = arith.truncf %30 : vector<16x32xf32> to vector<16x32xbf16>
    %c0_7 = arith.constant 0 : index
    %c0_8 = arith.constant 0 : index
    %32 = vector.load %arg2[%c0_7, %c0_8] : memref<32x96xbf16, #tpu.memory_space<vmem>>, vector<32x96xbf16>
    %cst_9 = arith.constant dense<0.000000e+00> : vector<16x96xf32>
    %33 = tpu.matmul %31, %32, %cst_9 {dimension_numbers = #tpu.dot_dimension_numbers<[1], [0], [0], [1], [0, 0, 1, 1], [], []>} : vector<16x32xbf16>, vector<32x96xbf16>, vector<16x96xf32> -> vector<16x96xf32>
    %34 = arith.truncf %33 : vector<16x96xf32> to vector<16x96xbf16>
    %35 = vector.shape_cast %34 : vector<16x96xbf16> to vector<2x8x96xbf16>
    %36 = vector.extract_strided_slice %35 {offsets = [0, 0, 0], sizes = [2, 8, 8], strides = [1, 1, 1]} : vector<2x8x96xbf16> to vector<2x8x8xbf16>
    %37 = vector.extract_strided_slice %35 {offsets = [0, 0, 32], sizes = [2, 8, 8], strides = [1, 1, 1]} : vector<2x8x96xbf16> to vector<2x8x8xbf16>
    %38 = vector.extract_strided_slice %35 {offsets = [0, 0, 64], sizes = [2, 8, 8], strides = [1, 1, 1]} : vector<2x8x96xbf16> to vector<2x8x8xbf16>
    "tpu.trace_start"() <{level = 10 : i32, message = "bnd,bmd->bnm"}> : () -> ()
    %cst_10 = arith.constant dense<0.000000e+00> : vector<2x8x8xf32>
    %39 = tpu.matmul %36, %37, %cst_10 {dimension_numbers = #tpu.dot_dimension_numbers<[2], [2], [1], [1], [0, 0, 0, 1, 1, 1], [0], [0]>} : vector<2x8x8xbf16>, vector<2x8x8xbf16>, vector<2x8x8xf32> -> vector<2x8x8xf32>
    "tpu.trace_stop"() : () -> ()
    %cst_11 = arith.constant dense<0xFF800000> : vector<2x8xf32>
    %40 = vector.multi_reduction <maximumf>, %39, %cst_11 [2] : vector<2x8x8xf32> to vector<2x8xf32>
    %41 = vector.shape_cast %40 : vector<2x8xf32> to vector<2x8x1xf32>
    %42 = vector.broadcast %41 : vector<2x8x1xf32> to vector<2x8x8xf32>
    %43 = arith.subf %39, %42 : vector<2x8x8xf32>
    %44 = math.exp %43 : vector<2x8x8xf32>
    %cst_12 = arith.constant dense<0.000000e+00> : vector<2x8xf32>
    %45 = vector.multi_reduction <add>, %44, %cst_12 [2] : vector<2x8x8xf32> to vector<2x8xf32>
    %46 = vector.shape_cast %45 : vector<2x8xf32> to vector<2x8x1xf32>
    %47 = vector.broadcast %46 : vector<2x8x1xf32> to vector<2x8x8xf32>
    %48 = arith.divf %44, %47 : vector<2x8x8xf32>
    %49 = arith.truncf %48 : vector<2x8x8xf32> to vector<2x8x8xbf16>
    "tpu.trace_start"() <{level = 10 : i32, message = "bnm,bmd->bnd"}> : () -> ()
    %cst_13 = arith.constant dense<0.000000e+00> : vector<2x8x8xf32>
    %50 = tpu.matmul %49, %38, %cst_13 {dimension_numbers = #tpu.dot_dimension_numbers<[2], [1], [1], [2], [0, 0, 0, 1, 1, 2], [0], [0]>} : vector<2x8x8xbf16>, vector<2x8x8xbf16>, vector<2x8x8xf32> -> vector<2x8x8xf32>
    "tpu.trace_stop"() : () -> ()
    %51 = vector.extract_strided_slice %35 {offsets = [0, 0, 8], sizes = [2, 8, 8], strides = [1, 1, 1]} : vector<2x8x96xbf16> to vector<2x8x8xbf16>
    %52 = vector.extract_strided_slice %35 {offsets = [0, 0, 40], sizes = [2, 8, 8], strides = [1, 1, 1]} : vector<2x8x96xbf16> to vector<2x8x8xbf16>
    %53 = vector.extract_strided_slice %35 {offsets = [0, 0, 72], sizes = [2, 8, 8], strides = [1, 1, 1]} : vector<2x8x96xbf16> to vector<2x8x8xbf16>
    "tpu.trace_start"() <{level = 10 : i32, message = "bnd,bmd->bnm"}> : () -> ()
    %cst_14 = arith.constant dense<0.000000e+00> : vector<2x8x8xf32>
    %54 = tpu.matmul %51, %52, %cst_14 {dimension_numbers = #tpu.dot_dimension_numbers<[2], [2], [1], [1], [0, 0, 0, 1, 1, 1], [0], [0]>} : vector<2x8x8xbf16>, vector<2x8x8xbf16>, vector<2x8x8xf32> -> vector<2x8x8xf32>
    "tpu.trace_stop"() : () -> ()
    %cst_15 = arith.constant dense<0xFF800000> : vector<2x8xf32>
    %55 = vector.multi_reduction <maximumf>, %54, %cst_15 [2] : vector<2x8x8xf32> to vector<2x8xf32>
    %56 = vector.shape_cast %55 : vector<2x8xf32> to vector<2x8x1xf32>
    %57 = vector.broadcast %56 : vector<2x8x1xf32> to vector<2x8x8xf32>
    %58 = arith.subf %54, %57 : vector<2x8x8xf32>
    %59 = math.exp %58 : vector<2x8x8xf32>
    %cst_16 = arith.constant dense<0.000000e+00> : vector<2x8xf32>
    %60 = vector.multi_reduction <add>, %59, %cst_16 [2] : vector<2x8x8xf32> to vector<2x8xf32>
    %61 = vector.shape_cast %60 : vector<2x8xf32> to vector<2x8x1xf32>
    %62 = vector.broadcast %61 : vector<2x8x1xf32> to vector<2x8x8xf32>
    %63 = arith.divf %59, %62 : vector<2x8x8xf32>
    %64 = arith.truncf %63 : vector<2x8x8xf32> to vector<2x8x8xbf16>
    "tpu.trace_start"() <{level = 10 : i32, message = "bnm,bmd->bnd"}> : () -> ()
    %cst_17 = arith.constant dense<0.000000e+00> : vector<2x8x8xf32>
    %65 = tpu.matmul %64, %53, %cst_17 {dimension_numbers = #tpu.dot_dimension_numbers<[2], [1], [1], [2], [0, 0, 0, 1, 1, 2], [0], [0]>} : vector<2x8x8xbf16>, vector<2x8x8xbf16>, vector<2x8x8xf32> -> vector<2x8x8xf32>
    "tpu.trace_stop"() : () -> ()
    %66 = vector.extract_strided_slice %35 {offsets = [0, 0, 16], sizes = [2, 8, 8], strides = [1, 1, 1]} : vector<2x8x96xbf16> to vector<2x8x8xbf16>
    %67 = vector.extract_strided_slice %35 {offsets = [0, 0, 48], sizes = [2, 8, 8], strides = [1, 1, 1]} : vector<2x8x96xbf16> to vector<2x8x8xbf16>
    %68 = vector.extract_strided_slice %35 {offsets = [0, 0, 80], sizes = [2, 8, 8], strides = [1, 1, 1]} : vector<2x8x96xbf16> to vector<2x8x8xbf16>
    "tpu.trace_start"() <{level = 10 : i32, message = "bnd,bmd->bnm"}> : () -> ()
    %cst_18 = arith.constant dense<0.000000e+00> : vector<2x8x8xf32>
    %69 = tpu.matmul %66, %67, %cst_18 {dimension_numbers = #tpu.dot_dimension_numbers<[2], [2], [1], [1], [0, 0, 0, 1, 1, 1], [0], [0]>} : vector<2x8x8xbf16>, vector<2x8x8xbf16>, vector<2x8x8xf32> -> vector<2x8x8xf32>
    "tpu.trace_stop"() : () -> ()
    %cst_19 = arith.constant dense<0xFF800000> : vector<2x8xf32>
    %70 = vector.multi_reduction <maximumf>, %69, %cst_19 [2] : vector<2x8x8xf32> to vector<2x8xf32>
    %71 = vector.shape_cast %70 : vector<2x8xf32> to vector<2x8x1xf32>
    %72 = vector.broadcast %71 : vector<2x8x1xf32> to vector<2x8x8xf32>
    %73 = arith.subf %69, %72 : vector<2x8x8xf32>
    %74 = math.exp %73 : vector<2x8x8xf32>
    %cst_20 = arith.constant dense<0.000000e+00> : vector<2x8xf32>
    %75 = vector.multi_reduction <add>, %74, %cst_20 [2] : vector<2x8x8xf32> to vector<2x8xf32>
    %76 = vector.shape_cast %75 : vector<2x8xf32> to vector<2x8x1xf32>
    %77 = vector.broadcast %76 : vector<2x8x1xf32> to vector<2x8x8xf32>
    %78 = arith.divf %74, %77 : vector<2x8x8xf32>
    %79 = arith.truncf %78 : vector<2x8x8xf32> to vector<2x8x8xbf16>
    "tpu.trace_start"() <{level = 10 : i32, message = "bnm,bmd->bnd"}> : () -> ()
    %cst_21 = arith.constant dense<0.000000e+00> : vector<2x8x8xf32>
    %80 = tpu.matmul %79, %68, %cst_21 {dimension_numbers = #tpu.dot_dimension_numbers<[2], [1], [1], [2], [0, 0, 0, 1, 1, 2], [0], [0]>} : vector<2x8x8xbf16>, vector<2x8x8xbf16>, vector<2x8x8xf32> -> vector<2x8x8xf32>
    "tpu.trace_stop"() : () -> ()
    %81 = vector.extract_strided_slice %35 {offsets = [0, 0, 24], sizes = [2, 8, 8], strides = [1, 1, 1]} : vector<2x8x96xbf16> to vector<2x8x8xbf16>
    %82 = vector.extract_strided_slice %35 {offsets = [0, 0, 56], sizes = [2, 8, 8], strides = [1, 1, 1]} : vector<2x8x96xbf16> to vector<2x8x8xbf16>
    %83 = vector.extract_strided_slice %35 {offsets = [0, 0, 88], sizes = [2, 8, 8], strides = [1, 1, 1]} : vector<2x8x96xbf16> to vector<2x8x8xbf16>
    "tpu.trace_start"() <{level = 10 : i32, message = "bnd,bmd->bnm"}> : () -> ()
    %cst_22 = arith.constant dense<0.000000e+00> : vector<2x8x8xf32>
    %84 = tpu.matmul %81, %82, %cst_22 {dimension_numbers = #tpu.dot_dimension_numbers<[2], [2], [1], [1], [0, 0, 0, 1, 1, 1], [0], [0]>} : vector<2x8x8xbf16>, vector<2x8x8xbf16>, vector<2x8x8xf32> -> vector<2x8x8xf32>
    "tpu.trace_stop"() : () -> ()
    %cst_23 = arith.constant dense<0xFF800000> : vector<2x8xf32>
    %85 = vector.multi_reduction <maximumf>, %84, %cst_23 [2] : vector<2x8x8xf32> to vector<2x8xf32>
    %86 = vector.shape_cast %85 : vector<2x8xf32> to vector<2x8x1xf32>
    %87 = vector.broadcast %86 : vector<2x8x1xf32> to vector<2x8x8xf32>
    %88 = arith.subf %84, %87 : vector<2x8x8xf32>
    %89 = math.exp %88 : vector<2x8x8xf32>
    %cst_24 = arith.constant dense<0.000000e+00> : vector<2x8xf32>
    %90 = vector.multi_reduction <add>, %89, %cst_24 [2] : vector<2x8x8xf32> to vector<2x8xf32>
    %91 = vector.shape_cast %90 : vector<2x8xf32> to vector<2x8x1xf32>
    %92 = vector.broadcast %91 : vector<2x8x1xf32> to vector<2x8x8xf32>
    %93 = arith.divf %89, %92 : vector<2x8x8xf32>
    %94 = arith.truncf %93 : vector<2x8x8xf32> to vector<2x8x8xbf16>
    "tpu.trace_start"() <{level = 10 : i32, message = "bnm,bmd->bnd"}> : () -> ()
    %cst_25 = arith.constant dense<0.000000e+00> : vector<2x8x8xf32>
    %95 = tpu.matmul %94, %83, %cst_25 {dimension_numbers = #tpu.dot_dimension_numbers<[2], [1], [1], [2], [0, 0, 0, 1, 1, 2], [0], [0]>} : vector<2x8x8xbf16>, vector<2x8x8xbf16>, vector<2x8x8xf32> -> vector<2x8x8xf32>
    "tpu.trace_stop"() : () -> ()
    %96 = tpu.concatenate %50, %65, %80, %95 in 2 : vector<2x8x8xf32>, vector<2x8x8xf32>, vector<2x8x8xf32>, vector<2x8x8xf32> -> vector<2x8x32xf32>
    %97 = vector.shape_cast %96 : vector<2x8x32xf32> to vector<16x32xf32>
    %98 = arith.truncf %97 : vector<16x32xf32> to vector<16x32xbf16>
    %c0_26 = arith.constant 0 : index
    %c0_27 = arith.constant 0 : index
    %99 = vector.load %arg3[%c0_26, %c0_27] : memref<32x32xbf16, #tpu.memory_space<vmem>>, vector<32x32xbf16>
    %cst_28 = arith.constant dense<0.000000e+00> : vector<16x32xf32>
    %100 = tpu.matmul %98, %99, %cst_28 {dimension_numbers = #tpu.dot_dimension_numbers<[1], [0], [0], [1], [0, 0, 1, 1], [], []>} : vector<16x32xbf16>, vector<32x32xbf16>, vector<16x32xf32> -> vector<16x32xf32>
    %101 = vector.broadcast %4 : vector<1x32xf32> to vector<16x32xf32>
    %102 = arith.addf %100, %101 : vector<16x32xf32>
    %103 = arith.addf %0, %102 : vector<16x32xf32>
    %cst_29 = arith.constant dense<0.000000e+00> : vector<16xf32>
    %104 = vector.multi_reduction <add>, %103, %cst_29 [1] : vector<16x32xf32> to vector<16xf32>
    %105 = vector.shape_cast %104 : vector<16xf32> to vector<16x1xf32>
    %cst_30 = arith.constant 3.200000e+01 : f32
    %106 = vector.broadcast %cst_30 : f32 to vector<16x1xf32>
    %107 = arith.divf %105, %106 : vector<16x1xf32>
    %108 = vector.broadcast %107 : vector<16x1xf32> to vector<16x32xf32>
    %109 = arith.subf %103, %108 : vector<16x32xf32>
    %110 = arith.mulf %109, %109 : vector<16x32xf32>
    %cst_31 = arith.constant dense<0.000000e+00> : vector<16xf32>
    %111 = vector.multi_reduction <add>, %110, %cst_31 [1] : vector<16x32xf32> to vector<16xf32>
    %112 = vector.shape_cast %111 : vector<16xf32> to vector<16x1xf32>
    %cst_32 = arith.constant 3.200000e+01 : f32
    %113 = vector.broadcast %cst_32 : f32 to vector<16x1xf32>
    %114 = arith.divf %112, %113 : vector<16x1xf32>
    %115 = vector.broadcast %107 : vector<16x1xf32> to vector<16x32xf32>
    %116 = arith.subf %103, %115 : vector<16x32xf32>
    %cst_33 = arith.constant 9.99999974E-6 : f32
    %117 = vector.broadcast %cst_33 : f32 to vector<16x1xf32>
    %118 = arith.addf %114, %117 : vector<16x1xf32>
    %119 = math.rsqrt %118 : vector<16x1xf32>
    %120 = vector.broadcast %119 : vector<16x1xf32> to vector<16x32xf32>
    %121 = arith.mulf %116, %120 : vector<16x32xf32>
    %122 = vector.broadcast %5 : vector<1x32xf32> to vector<16x32xf32>
    %123 = arith.mulf %121, %122 : vector<16x32xf32>
    %124 = vector.broadcast %6 : vector<1x32xf32> to vector<16x32xf32>
    %125 = arith.addf %123, %124 : vector<16x32xf32>
    %126 = arith.truncf %125 : vector<16x32xf32> to vector<16x32xbf16>
    %c0_34 = arith.constant 0 : index
    %c0_35 = arith.constant 0 : index
    %127 = vector.load %arg4[%c0_34, %c0_35] : memref<32x128xbf16, #tpu.memory_space<vmem>>, vector<32x128xbf16>
    %cst_36 = arith.constant dense<0.000000e+00> : vector<16x128xf32>
    %128 = tpu.matmul %126, %127, %cst_36 {dimension_numbers = #tpu.dot_dimension_numbers<[1], [0], [0], [1], [0, 0, 1, 1], [], []>} : vector<16x32xbf16>, vector<32x128xbf16>, vector<16x128xf32> -> vector<16x128xf32>
    %129 = vector.broadcast %7 : vector<1x128xf32> to vector<16x128xf32>
    %130 = arith.addf %128, %129 : vector<16x128xf32>
    %cst_37 = arith.constant 5.000000e-01 : f32
    %131 = vector.broadcast %cst_37 : f32 to vector<16x128xf32>
    %132 = arith.mulf %131, %130 : vector<16x128xf32>
    %cst_38 = arith.constant 0.707106769 : f32
    %133 = vector.broadcast %cst_38 : f32 to vector<16x128xf32>
    %134 = arith.mulf %130, %133 : vector<16x128xf32>
    %cst_39 = arith.constant 0.000000e+00 : f32
    %135 = vector.broadcast %cst_39 : f32 to vector<16x128xf32>
    %136 = arith.cmpf oge, %134, %135 : vector<16x128xf32>
    %cst_40 = arith.constant 1.000000e+00 : f32
    %cst_41 = arith.constant -1.000000e+00 : f32
    %137 = vector.broadcast %cst_40 : f32 to vector<16x128xf32>
    %138 = vector.broadcast %cst_41 : f32 to vector<16x128xf32>
    %139 = arith.select %136, %137, %138 : vector<16x128xi1>, vector<16x128xf32>
    %140 = math.absf %134 : vector<16x128xf32>
    %cst_42 = arith.constant 0.327591091 : f32
    %141 = vector.broadcast %cst_42 : f32 to vector<16x128xf32>
    %142 = arith.mulf %141, %140 : vector<16x128xf32>
    %cst_43 = arith.constant 1.000000e+00 : f32
    %143 = vector.broadcast %cst_43 : f32 to vector<16x128xf32>
    %144 = arith.addf %143, %142 : vector<16x128xf32>
    %cst_44 = arith.constant 1.000000e+00 : f32
    %145 = vector.broadcast %cst_44 : f32 to vector<16x128xf32>
    %146 = arith.divf %145, %144 : vector<16x128xf32>
    %cst_45 = arith.constant 1.06140542 : f32
    %147 = vector.broadcast %cst_45 : f32 to vector<16x128xf32>
    %148 = arith.mulf %147, %146 : vector<16x128xf32>
    %cst_46 = arith.constant -1.45315206 : f32
    %149 = vector.broadcast %cst_46 : f32 to vector<16x128xf32>
    %150 = arith.addf %148, %149 : vector<16x128xf32>
    %151 = arith.mulf %150, %146 : vector<16x128xf32>
    %cst_47 = arith.constant 1.42141378 : f32
    %152 = vector.broadcast %cst_47 : f32 to vector<16x128xf32>
    %153 = arith.addf %151, %152 : vector<16x128xf32>
    %154 = arith.mulf %153, %146 : vector<16x128xf32>
    %cst_48 = arith.constant -0.284496725 : f32
    %155 = vector.broadcast %cst_48 : f32 to vector<16x128xf32>
    %156 = arith.addf %154, %155 : vector<16x128xf32>
    %157 = arith.mulf %156, %146 : vector<16x128xf32>
    %cst_49 = arith.constant 0.254829586 : f32
    %158 = vector.broadcast %cst_49 : f32 to vector<16x128xf32>
    %159 = arith.addf %157, %158 : vector<16x128xf32>
    %160 = arith.mulf %159, %146 : vector<16x128xf32>
    %cst_50 = arith.constant 0.000000e+00 : f32
    %161 = vector.broadcast %cst_50 : f32 to vector<16x128xf32>
    %162 = arith.subf %161, %140 : vector<16x128xf32>
    %163 = arith.mulf %162, %140 : vector<16x128xf32>
    %164 = math.exp %163 : vector<16x128xf32>
    %165 = arith.mulf %160, %164 : vector<16x128xf32>
    %cst_51 = arith.constant 1.000000e+00 : f32
    %166 = vector.broadcast %cst_51 : f32 to vector<16x128xf32>
    %167 = arith.subf %166, %165 : vector<16x128xf32>
    %168 = arith.mulf %139, %167 : vector<16x128xf32>
    %cst_52 = arith.constant 1.000000e+00 : f32
    %169 = vector.broadcast %cst_52 : f32 to vector<16x128xf32>
    %170 = arith.addf %169, %168 : vector<16x128xf32>
    %171 = arith.mulf %132, %170 : vector<16x128xf32>
    %172 = arith.truncf %171 : vector<16x128xf32> to vector<16x128xbf16>
    %c0_53 = arith.constant 0 : index
    %c0_54 = arith.constant 0 : index
    %173 = vector.load %arg5[%c0_53, %c0_54] : memref<128x32xbf16, #tpu.memory_space<vmem>>, vector<128x32xbf16>
    %cst_55 = arith.constant dense<0.000000e+00> : vector<16x32xf32>
    %174 = tpu.matmul %172, %173, %cst_55 {dimension_numbers = #tpu.dot_dimension_numbers<[1], [0], [0], [1], [0, 0, 1, 1], [], []>} : vector<16x128xbf16>, vector<128x32xbf16>, vector<16x32xf32> -> vector<16x32xf32>
    %175 = vector.broadcast %8 : vector<1x32xf32> to vector<16x32xf32>
    %176 = arith.addf %174, %175 : vector<16x32xf32>
    %177 = arith.addf %103, %176 : vector<16x32xf32>
    %c0_56 = arith.constant 0 : index
    %c0_57 = arith.constant 0 : index
    %178 = vector.load %arg6[%c0_56, %c0_57] : memref<16x32xf32, #tpu.memory_space<vmem>>, vector<16x32xf32>
    tpu.vector_store %arg6[%c0_56, %c0_57], %177 {strides = array<i32>} : memref<16x32xf32, #tpu.memory_space<vmem>>, vector<16x32xf32>,
    return
  }
}

</mosaic_0001>

<llo_original>
// kernel: vit_block.1
$region0: #{vit_block.1}
  #allocation0 [shape = 'u32[]', space=smem, size = 0x4, offset = 0x4, fixed_abs, tag = 'smem constant byte address 0x4 - core index']
  #allocation1 [shape = 'u32[144,128]{1,0:T(1,128)}', space=vmem, size = 0x12000, scoped, tag = 'internal scratch']
  %s0 = inlined_call_operand.vmem [shape: f32[16,32], index: 0, kind: input, shape index: {}]
  %s1 = inlined_call_operand.vmem [shape: f32[8,128], index: 1, kind: input, shape index: {}]
  %s2 = inlined_call_operand.vmem [shape: bf16[32,96], index: 2, kind: input, shape index: {}]
  %s3 = inlined_call_operand.vmem [shape: bf16[32,32], index: 3, kind: input, shape index: {}]
  %s4 = inlined_call_operand.vmem [shape: bf16[32,128], index: 4, kind: input, shape index: {}]
  %s5 = inlined_call_operand.vmem [shape: bf16[128,32], index: 5, kind: input, shape index: {}]
  %s6 = inlined_call_operand.hbm [shape: f32[16,32], index: 6, kind: output, shape index: {}]
  %s7 = sld [smem:[#allocation0]]
  $region34: #{vit_block.1} parent=0
    _
  %s9 = ssub.s32 1, %s7
  %s10 = scalar_select 0, %s9, %s7
  $region1: #{vit_block.1} parent=0
    #allocation2 [shape = 'u8[8192]{0}', space=vmem, size = 0x2000, scoped, tag = 'output window, operand 0, single buffered']
    #allocation3 [shape = 's32[1]{0}', space=sflag, size = 0x4, scoped, tag = 'scoped memory for vit_block.1']
    %11 = vsyncpa [#allocation3], 0
    // Predicated region
    $region2: #{vit_block.1} parent=1 // pred_check
      _
    $region3: #{vit_block.1} parent=1 // pred_check_branch
      %13 = sbr.rel (0) target = $region5
    $region4: #{vit_block.1} parent=1 // pred_region
      _
    $region5: #{vit_block.1} parent=1 // pred_fallthru
      _
    // Predicated region
    $region6: #{vit_block.1} parent=1 // pred_check
      _
    $region7: #{vit_block.1} parent=1 // pred_check_branch
      %15 = sbr.rel (0) target = $region9
    $region8: #{vit_block.1} parent=1 // pred_region
      _
    $region9: #{vit_block.1} parent=1 // pred_fallthru
      _
    // Predicated region
    $region10: #{vit_block.1} parent=1 // pred_check
      _
    $region11: #{vit_block.1} parent=1 // pred_check_branch
      %17 = sbr.rel (0) target = $region13
    $region12: #{vit_block.1} parent=1 // pred_region
      _
    $region13: #{vit_block.1} parent=1 // pred_fallthru
      _
    // Predicated region
    $region14: #{vit_block.1} parent=1 // pred_check
      _
    $region15: #{vit_block.1} parent=1 // pred_check_branch
      %19 = sbr.rel (0) target = $region17
    $region16: #{vit_block.1} parent=1 // pred_region
      _
    $region17: #{vit_block.1} parent=1 // pred_fallthru
      _
    // Predicated region
    $region18: #{vit_block.1} parent=1 // pred_check
      _
    $region19: #{vit_block.1} parent=1 // pred_check_branch
      %21 = sbr.rel (0) target = $region21
    $region20: #{vit_block.1} parent=1 // pred_region
      _
    $region21: #{vit_block.1} parent=1 // pred_fallthru
      _
    // Predicated region
    $region22: #{vit_block.1} parent=1 // pred_check
      _
    $region23: #{vit_block.1} parent=1 // pred_check_branch
      %23 = sbr.rel (0) target = $region25
    $region24: #{vit_block.1} parent=1 // pred_region
      _
    $region25: #{vit_block.1} parent=1 // pred_fallthru
      _
    %v25 = vld [vmem:[%s0] sm:$0xff]
    %v26 = vld [vmem:[%s0 + $0x8] sm:$0xff]
    %v27 = vld [vmem:[%s1] sm:$0xff]
    %vm28 = vcmask 261120
    %v29 = vsel %vm28, %v25, 0.0
    %30 = vadd.xlane.f32.xlu0 %v29
    %v31 = vpop.xlane.xlu0 %30
    %v32 = vsel %vm28, %v26, 0.0
    %33 = vadd.xlane.f32.xlu0 %v32
    %v34 = vpop.xlane.xlu0 %33
    %v35 = vrcp.pop 32.0
    %v36 = vmul.f32 %v31, %v35
    %v37 = vmul.f32 %v34, %v35
    %v38 = vsub.f32 %v25, %v36
    %v39 = vsub.f32 %v26, %v37
    %v40 = vmul.f32 %v38, %v38
    %v41 = vmul.f32 %v39, %v39
    %v42 = vsel %vm28, %v40, 0.0
    %43 = vadd.xlane.f32.xlu0 %v42
    %v44 = vpop.xlane.xlu0 %43
    %v45 = vsel %vm28, %v41, 0.0
    %46 = vadd.xlane.f32.xlu0 %v45
    %v47 = vpop.xlane.xlu0 %46
    %v48 = vmul.f32 %v44, %v35
    %v49 = vmul.f32 %v47, %v35
    %v50 = vadd.f32 %v48, 1e-05
    %v51 = vadd.f32 %v49, 1e-05
    %v52 = vrsqrt.pop %v50
    %v53 = vrsqrt.pop %v51
    %v54 = vmul.f32 %v38, %v52
    %v55 = vmul.f32 %v39, %v53
    %v56 = vlaneseq
    %v57 = vshrl.u32 %v56, 7
    %v58 = vsub.s32 0, %v57
    %v59 = vrot.slane %v27, %v58
    %v60 = vmul.f32 %v54, %v59
    %v61 = vmul.f32 %v55, %v59
    %v62 = vlaneseq
    %v63 = vshrl.u32 %v62, 7
    %v64 = vsub.s32 1, %v63
    %v65 = vrot.slane %v27, %v64
    %v66 = vadd.f32 %v60, %v65
    %v67 = vadd.f32 %v61, %v65
    %v68 = vpack.c.bf16 %v67, %v66
    %v69 = vld [vmem:[%s2] sm:$0xf]
    %v70 = vld [vmem:[%s2 + $0x4] sm:$0xf]
    %v71 = vld [vmem:[%s2 + $0x8] sm:$0xf]
    %v72 = vld [vmem:[%s2 + $0xc] sm:$0xf]
    %v77 = vunpack.c.l.b16 %v69
    %v78 = vunpack.c.l.b16 %v70
    %v79 = vunpack.c.l.b16 %v71
    %v80 = vunpack.c.l.b16 %v72
    %v81 = vpack.c.b16 %v78, %v77
    %v82 = vpack.c.b16 %v80, %v79
    %v86 = vsel %vm28, %v68, 0
    %88 = vmatprep.subr.bf16.mxu0 0
    %89 = vmatpush1.bf16.msra.mxu0 %v81
    %90 = vmatprep.subr.bf16.mxu0 0
    %91 = vmatpush1.bf16.msra.mxu0 %v82
    %92 = vmatprep.subr.bf16.mxu0 0
    %93 = vmatpush1.bf16.msra.mxu0 0
    %94 = vmatprep.subr.bf16.mxu0 0
    %95 = vmatpush1.bf16.msra.mxu0 0
    %96 = vmatprep.subr.bf16.mxu0 0
    %97 = vmatpush1.bf16.msra.mxu0 0
    %98 = vmatprep.subr.bf16.mxu0 0
    %99 = vmatpush1.bf16.msra.mxu0 0
    %100 = vmatprep.subr.bf16.mxu0 0
    %101 = vmatpush1.bf16.msra.mxu0 0
    %102 = vmatprep.subr.bf16.mxu0 0
    %103 = vmatpush1.bf16.msra.mxu0 0
    %104 = vmatprep.subr.bf16.mxu0 0
    %105 = vmatpush1.bf16.msra.mxu0 0
    %106 = vmatprep.subr.bf16.mxu0 0
    %107 = vmatpush1.bf16.msra.mxu0 0
    %108 = vmatprep.subr.bf16.mxu0 0
    %109 = vmatpush1.bf16.msra.mxu0 0
    %110 = vmatprep.subr.bf16.mxu0 0
    %111 = vmatpush1.bf16.msra.mxu0 0
    %112 = vmatprep.subr.bf16.mxu0 0
    %113 = vmatpush1.bf16.msra.mxu0 0
    %114 = vmatprep.subr.bf16.mxu0 0
    %115 = vmatpush1.bf16.msra.mxu0 0
    %116 = vmatprep.subr.bf16.mxu0 0
    %117 = vmatpush1.bf16.msra.mxu0 0
    %118 = vmatprep.subr.bf16.mxu0 0
    %119 = vmatpush1.bf16.msra.mxu0 0
    %120 = vmatprep.mubr.bf16.mxu0 0
    %121 = vmatmul.mubr.bf16.gmra.mrb[0].mxu0 %v86
    %v122 = vpop.f32.mrb[0].mxu0
    %v123 = vadd.f32 0.0, %v122
    %v124 = vpop.f32.mrb[0].mxu0
    %v125 = vpop.f32.mrb[0].mxu0
    %v126 = vadd.f32 0.0, %v125
    %v127 = vpop.f32.mrb[0].mxu0
    %128 = vdwg.mxu0
    %v129 = vpack.c.bf16 %v126, %v123
    %v131 = vunpack.c.l.b16 %v129
    %v132 = vunpack.c.h.b16 %v129
    %v133 = vpack.c.b16 %v131, %v131
    %v134 = vpack.c.b16 %v132, %v132
    %135 = vrot.lane.b32.xlu0 %v133, 96
    %v136 = vpop.permute.xlu0 %135
    %vm137 = vcmask 64512
    %v139 = vsel %vm137, %v133, 0
    %v142 = vsel %vm137, %v136, 0
    %144 = vmatprep.subr.bf16.mxu0 0
    %145 = vmatpush1.bf16.xpose.msra.mxu0 %v142
    %146 = vmatprep.subr.bf16.mxu0 0
    %147 = vmatpush1.bf16.xpose.msra.mxu0 0
    %148 = vmatprep.subr.bf16.mxu0 0
    %149 = vmatpush1.bf16.xpose.msra.mxu0 0
    %150 = vmatprep.subr.bf16.mxu0 0
    %151 = vmatpush1.bf16.xpose.msra.mxu0 0
    %152 = vmatprep.subr.bf16.mxu0 0
    %153 = vmatpush1.bf16.xpose.msra.mxu0 0
    %154 = vmatprep.subr.bf16.mxu0 0
    %155 = vmatpush1.bf16.xpose.msra.mxu0 0
    %156 = vmatprep.subr.bf16.mxu0 0
    %157 = vmatpush1.bf16.xpose.msra.mxu0 0
    %158 = vmatprep.subr.bf16.mxu0 0
    %159 = vmatpush1.bf16.xpose.msra.mxu0 0
    %160 = vmatprep.subr.bf16.mxu0 0
    %161 = vmatpush1.bf16.xpose.msra.mxu0 0
    %162 = vmatprep.subr.bf16.mxu0 0
    %163 = vmatpush1.bf16.xpose.msra.mxu0 0
    %164 = vmatprep.subr.bf16.mxu0 0
    %165 = vmatpush1.bf16.xpose.msra.mxu0 0
    %166 = vmatprep.subr.bf16.mxu0 0
    %167 = vmatpush1.bf16.xpose.msra.mxu0 0
    %168 = vmatprep.subr.bf16.mxu0 0
    %169 = vmatpush1.bf16.xpose.msra.mxu0 0
    %170 = vmatprep.subr.bf16.mxu0 0
    %171 = vmatpush1.bf16.xpose.msra.mxu0 0
    %172 = vmatprep.subr.bf16.mxu0 0
    %173 = vmatpush1.bf16.xpose.msra.mxu0 0
    %174 = vmatprep.subr.bf16.mxu0 0
    %175 = vmatpush1.bf16.xpose.msra.mxu0 0
    %176 = vmatprep.mubr.bf16.mxu0 0
    %177 = vmatmul.mubr.bf16.gmra.mrb[0].mxu0 %v139
    %v178 = vpop.f32.mrb[0].mxu0
    %v179 = vadd.f32 0.0, %v178
    %v180 = vpop.f32.mrb[0].mxu0
    %v181 = vpop.f32.mrb[0].mxu0
    %v182 = vpop.f32.mrb[0].mxu0
    %183 = vdwg.mxu0
    %184 = vrot.lane.b32.xlu0 %v134, 96
    %v185 = vpop.permute.xlu0 %184
    %v187 = vsel %vm137, %v134, 0
    %v190 = vsel %vm137, %v185, 0
    %192 = vmatprep.subr.bf16.mxu0 0
    %193 = vmatpush1.bf16.xpose.msra.mxu0 %v190
    %194 = vmatprep.subr.bf16.mxu0 0
    %195 = vmatpush1.bf16.xpose.msra.mxu0 0
    %196 = vmatprep.subr.bf16.mxu0 0
    %197 = vmatpush1.bf16.xpose.msra.mxu0 0
    %198 = vmatprep.subr.bf16.mxu0 0
    %199 = vmatpush1.bf16.xpose.msra.mxu0 0
    %200 = vmatprep.subr.bf16.mxu0 0
    %201 = vmatpush1.bf16.xpose.msra.mxu0 0
    %202 = vmatprep.subr.bf16.mxu0 0
    %203 = vmatpush1.bf16.xpose.msra.mxu0 0
    %204 = vmatprep.subr.bf16.mxu0 0
    %205 = vmatpush1.bf16.xpose.msra.mxu0 0
    %206 = vmatprep.subr.bf16.mxu0 0
    %207 = vmatpush1.bf16.xpose.msra.mxu0 0
    %208 = vmatprep.subr.bf16.mxu0 0
    %209 = vmatpush1.bf16.xpose.msra.mxu0 0
    %210 = vmatprep.subr.bf16.mxu0 0
    %211 = vmatpush1.bf16.xpose.msra.mxu0 0
    %212 = vmatprep.subr.bf16.mxu0 0
    %213 = vmatpush1.bf16.xpose.msra.mxu0 0
    %214 = vmatprep.subr.bf16.mxu0 0
    %215 = vmatpush1.bf16.xpose.msra.mxu0 0
    %216 = vmatprep.subr.bf16.mxu0 0
    %217 = vmatpush1.bf16.xpose.msra.mxu0 0
    %218 = vmatprep.subr.bf16.mxu0 0
    %219 = vmatpush1.bf16.xpose.msra.mxu0 0
    %220 = vmatprep.subr.bf16.mxu0 0
    %221 = vmatpush1.bf16.xpose.msra.mxu0 0
    %222 = vmatprep.subr.bf16.mxu0 0
    %223 = vmatpush1.bf16.xpose.msra.mxu0 0
    %224 = vmatprep.mubr.bf16.mxu0 0
    %225 = vmatmul.mubr.bf16.gmra.mrb[0].mxu0 %v187
    %v226 = vpop.f32.mrb[0].mxu0
    %v227 = vadd.f32 0.0, %v226
    %v228 = vpop.f32.mrb[0].mxu0
    %v229 = vpop.f32.mrb[0].mxu0
    %v230 = vpop.f32.mrb[0].mxu0
    %231 = vdwg.mxu0
    %v232 = vsel %vm137, %v179, -inf
    %233 = vmax.xlane.f32.xlu0 %v232
    %v234 = vpop.xlane.xlu0 %233
    %v235 = vsel %vm137, %v227, -inf
    %236 = vmax.xlane.f32.xlu0 %v235
    %v237 = vpop.xlane.xlu0 %236
    %v238 = vsub.f32 %v179, %v234
    %v239 = vsub.f32 %v227, %v237
    %v240 = vmul.f32 %v238, 1.442695
    %v241 = vpow.pop %v240
    %v242 = vmul.f32 %v239, 1.442695
    %v243 = vpow.pop %v242
    %v244 = vsel %vm137, %v241, 0.0
    %245 = vadd.xlane.f32.xlu0 %v244
    %v246 = vpop.xlane.xlu0 %245
    %v247 = vsel %vm137, %v243, 0.0
    %248 = vadd.xlane.f32.xlu0 %v247
    %v249 = vpop.xlane.xlu0 %248
    %v250 = vrcp.pop %v246
    %v251 = vmul.f32 %v241, %v250
    %v252 = vrcp.pop %v249
    %v253 = vmul.f32 %v243, %v252
    %v254 = vpack.c.bf16 %v251, %v251
    %v255 = vpack.c.bf16 %v253, %v253
    %256 = vrot.lane.b32.xlu0 %v133, 64
    %v257 = vpop.permute.xlu0 %256
    %v259 = vsel %vm137, %v254, 0
    %vm261 = vcmask 1043456
    %v263 = vsel %vm261, %v257, 0
    %265 = vmatprep.subr.bf16.mxu0 0
    %266 = vmatpush1.bf16.msra.mxu0 %v263
    %267 = vmatprep.subr.bf16.mxu0 0
    %268 = vmatpush1.bf16.msra.mxu0 0
    %269 = vmatprep.subr.bf16.mxu0 0
    %270 = vmatpush1.bf16.msra.mxu0 0
    %271 = vmatprep.subr.bf16.mxu0 0
    %272 = vmatpush1.bf16.msra.mxu0 0
    %273 = vmatprep.subr.bf16.mxu0 0
    %274 = vmatpush1.bf16.msra.mxu0 0
    %275 = vmatprep.subr.bf16.mxu0 0
    %276 = vmatpush1.bf16.msra.mxu0 0
    %277 = vmatprep.subr.bf16.mxu0 0
    %278 = vmatpush1.bf16.msra.mxu0 0
    %279 = vmatprep.subr.bf16.mxu0 0
    %280 = vmatpush1.bf16.msra.mxu0 0
    %281 = vmatprep.subr.bf16.mxu0 0
    %282 = vmatpush1.bf16.msra.mxu0 0
    %283 = vmatprep.subr.bf16.mxu0 0
    %284 = vmatpush1.bf16.msra.mxu0 0
    %285 = vmatprep.subr.bf16.mxu0 0
    %286 = vmatpush1.bf16.msra.mxu0 0
    %287 = vmatprep.subr.bf16.mxu0 0
    %288 = vmatpush1.bf16.msra.mxu0 0
    %289 = vmatprep.subr.bf16.mxu0 0
    %290 = vmatpush1.bf16.msra.mxu0 0
    %291 = vmatprep.subr.bf16.mxu0 0
    %292 = vmatpush1.bf16.msra.mxu0 0
    %293 = vmatprep.subr.bf16.mxu0 0
    %294 = vmatpush1.bf16.msra.mxu0 0
    %295 = vmatprep.subr.bf16.mxu0 0
    %296 = vmatpush1.bf16.msra.mxu0 0
    %297 = vmatprep.mubr.bf16.mxu0 0
    %298 = vmatmul.mubr.bf16.gmra.mrb[0].mxu0 %v259
    %v299 = vpop.f32.mrb[0].mxu0
    %v300 = vadd.f32 0.0, %v299
    %v301 = vpop.f32.mrb[0].mxu0
    %v302 = vpop.f32.mrb[0].mxu0
    %v303 = vpop.f32.mrb[0].mxu0
    %304 = vdwg.mxu0
    %305 = vrot.lane.b32.xlu0 %v134, 64
    %v306 = vpop.permute.xlu0 %305
    %v308 = vsel %vm137, %v255, 0
    %v311 = vsel %vm261, %v306, 0
    %313 = vmatprep.subr.bf16.mxu0 0
    %314 = vmatpush1.bf16.msra.mxu0 %v311
    %315 = vmatprep.subr.bf16.mxu0 0
    %316 = vmatpush1.bf16.msra.mxu0 0
    %317 = vmatprep.subr.bf16.mxu0 0
    %318 = vmatpush1.bf16.msra.mxu0 0
    %319 = vmatprep.subr.bf16.mxu0 0
    %320 = vmatpush1.bf16.msra.mxu0 0
    %321 = vmatprep.subr.bf16.mxu0 0
    %322 = vmatpush1.bf16.msra.mxu0 0
    %323 = vmatprep.subr.bf16.mxu0 0
    %324 = vmatpush1.bf16.msra.mxu0 0
    %325 = vmatprep.subr.bf16.mxu0 0
    %326 = vmatpush1.bf16.msra.mxu0 0
    %327 = vmatprep.subr.bf16.mxu0 0
    %328 = vmatpush1.bf16.msra.mxu0 0
    %329 = vmatprep.subr.bf16.mxu0 0
    %330 = vmatpush1.bf16.msra.mxu0 0
    %331 = vmatprep.subr.bf16.mxu0 0
    %332 = vmatpush1.bf16.msra.mxu0 0
    %333 = vmatprep.subr.bf16.mxu0 0
    %334 = vmatpush1.bf16.msra.mxu0 0
    %335 = vmatprep.subr.bf16.mxu0 0
    %336 = vmatpush1.bf16.msra.mxu0 0
    %337 = vmatprep.subr.bf16.mxu0 0
    %338 = vmatpush1.bf16.msra.mxu0 0
    %339 = vmatprep.subr.bf16.mxu0 0
    %340 = vmatpush1.bf16.msra.mxu0 0
    %341 = vmatprep.subr.bf16.mxu0 0
    %342 = vmatpush1.bf16.msra.mxu0 0
    %343 = vmatprep.subr.bf16.mxu0 0
    %344 = vmatpush1.bf16.msra.mxu0 0
    %345 = vmatprep.mubr.bf16.mxu0 0
    %346 = vmatmul.mubr.bf16.gmra.mrb[0].mxu0 %v308
    %v347 = vpop.f32.mrb[0].mxu0
    %v348 = vadd.f32 0.0, %v347
    %v349 = vpop.f32.mrb[0].mxu0
    %v350 = vpop.f32.mrb[0].mxu0
    %v351 = vpop.f32.mrb[0].mxu0
    %352 = vdwg.mxu0
    %353 = vrot.lane.b32.xlu0 %v133, 120
    %v354 = vpop.permute.xlu0 %353
    %355 = vrot.lane.b32.xlu0 %v133, 88
    %v356 = vpop.permute.xlu0 %355
    %v358 = vsel %vm137, %v354, 0
    %v361 = vsel %vm137, %v356, 0
    %363 = vmatprep.subr.bf16.mxu0 0
    %364 = vmatpush1.bf16.xpose.msra.mxu0 %v361
    %365 = vmatprep.subr.bf16.mxu0 0
    %366 = vmatpush1.bf16.xpose.msra.mxu0 0
    %367 = vmatprep.subr.bf16.mxu0 0
    %368 = vmatpush1.bf16.xpose.msra.mxu0 0
    %369 = vmatprep.subr.bf16.mxu0 0
    %370 = vmatpush1.bf16.xpose.msra.mxu0 0
    %371 = vmatprep.subr.bf16.mxu0 0
    %372 = vmatpush1.bf16.xpose.msra.mxu0 0
    %373 = vmatprep.subr.bf16.mxu0 0
    %374 = vmatpush1.bf16.xpose.msra.mxu0 0
    %375 = vmatprep.subr.bf16.mxu0 0
    %376 = vmatpush1.bf16.xpose.msra.mxu0 0
    %377 = vmatprep.subr.bf16.mxu0 0
    %378 = vmatpush1.bf16.xpose.msra.mxu0 0
    %379 = vmatprep.subr.bf16.mxu0 0
    %380 = vmatpush1.bf16.xpose.msra.mxu0 0
    %381 = vmatprep.subr.bf16.mxu0 0
    %382 = vmatpush1.bf16.xpose.msra.mxu0 0
    %383 = vmatprep.subr.bf16.mxu0 0
    %384 = vmatpush1.bf16.xpose.msra.mxu0 0
    %385 = vmatprep.subr.bf16.mxu0 0
    %386 = vmatpush1.bf16.xpose.msra.mxu0 0
    %387 = vmatprep.subr.bf16.mxu0 0
    %388 = vmatpush1.bf16.xpose.msra.mxu0 0
    %389 = vmatprep.subr.bf16.mxu0 0
    %390 = vmatpush1.bf16.xpose.msra.mxu0 0
    %391 = vmatprep.subr.bf16.mxu0 0
    %392 = vmatpush1.bf16.xpose.msra.mxu0 0
    %393 = vmatprep.subr.bf16.mxu0 0
    %394 = vmatpush1.bf16.xpose.msra.mxu0 0
    %395 = vmatprep.mubr.bf16.mxu0 0
    %396 = vmatmul.mubr.bf16.gmra.mrb[0].mxu0 %v358
    %v397 = vpop.f32.mrb[0].mxu0
    %v398 = vadd.f32 0.0, %v397
    %v399 = vpop.f32.mrb[0].mxu0
    %v400 = vpop.f32.mrb[0].mxu0
    %v401 = vpop.f32.mrb[0].mxu0
    %402 = vdwg.mxu0
    %403 = vrot.lane.b32.xlu0 %v134, 120
    %v404 = vpop.permute.xlu0 %403
    %405 = vrot.lane.b32.xlu0 %v134, 88
    %v406 = vpop.permute.xlu0 %405
    %v408 = vsel %vm137, %v404, 0
    %v411 = vsel %vm137, %v406, 0
    %413 = vmatprep.subr.bf16.mxu0 0
    %414 = vmatpush1.bf16.xpose.msra.mxu0 %v411
    %415 = vmatprep.subr.bf16.mxu0 0
    %416 = vmatpush1.bf16.xpose.msra.mxu0 0
    %417 = vmatprep.subr.bf16.mxu0 0
    %418 = vmatpush1.bf16.xpose.msra.mxu0 0
    %419 = vmatprep.subr.bf16.mxu0 0
    %420 = vmatpush1.bf16.xpose.msra.mxu0 0
    %421 = vmatprep.subr.bf16.mxu0 0
    %422 = vmatpush1.bf16.xpose.msra.mxu0 0
    %423 = vmatprep.subr.bf16.mxu0 0
    %424 = vmatpush1.bf16.xpose.msra.mxu0 0
    %425 = vmatprep.subr.bf16.mxu0 0
    %426 = vmatpush1.bf16.xpose.msra.mxu0 0
    %427 = vmatprep.subr.bf16.mxu0 0
    %428 = vmatpush1.bf16.xpose.msra.mxu0 0
    %429 = vmatprep.subr.bf16.mxu0 0
    %430 = vmatpush1.bf16.xpose.msra.mxu0 0
    %431 = vmatprep.subr.bf16.mxu0 0
    %432 = vmatpush1.bf16.xpose.msra.mxu0 0
    %433 = vmatprep.subr.bf16.mxu0 0
    %434 = vmatpush1.bf16.xpose.msra.mxu0 0
    %435 = vmatprep.subr.bf16.mxu0 0
    %436 = vmatpush1.bf16.xpose.msra.mxu0 0
    %437 = vmatprep.subr.bf16.mxu0 0
    %438 = vmatpush1.bf16.xpose.msra.mxu0 0
    %439 = vmatprep.subr.bf16.mxu0 0
    %440 = vmatpush1.bf16.xpose.msra.mxu0 0
    %441 = vmatprep.subr.bf16.mxu0 0
    %442 = vmatpush1.bf16.xpose.msra.mxu0 0
    %443 = vmatprep.subr.bf16.mxu0 0
    %444 = vmatpush1.bf16.xpose.msra.mxu0 0
    %445 = vmatprep.mubr.bf16.mxu0 0
    %446 = vmatmul.mubr.bf16.gmra.mrb[0].mxu0 %v408
    %v447 = vpop.f32.mrb[0].mxu0
    %v448 = vadd.f32 0.0, %v447
    %v449 = vpop.f32.mrb[0].mxu0
    %v450 = vpop.f32.mrb[0].mxu0
    %v451 = vpop.f32.mrb[0].mxu0
    %452 = vdwg.mxu0
    %v453 = vsel %vm137, %v398, -inf
    %454 = vmax.xlane.f32.xlu0 %v453
    %v455 = vpop.xlane.xlu0 %454
    %v456 = vsel %vm137, %v448, -inf
    %457 = vmax.xlane.f32.xlu0 %v456
    %v458 = vpop.xlane.xlu0 %457
    %v459 = vsub.f32 %v398, %v455
    %v460 = vsub.f32 %v448, %v458
    %v461 = vmul.f32 %v459, 1.442695
    %v462 = vpow.pop %v461
    %v463 = vmul.f32 %v460, 1.442695
    %v464 = vpow.pop %v463
    %v465 = vsel %vm137, %v462, 0.0
    %466 = vadd.xlane.f32.xlu0 %v465
    %v467 = vpop.xlane.xlu0 %466
    %v468 = vsel %vm137, %v464, 0.0
    %469 = vadd.xlane.f32.xlu0 %v468
    %v470 = vpop.xlane.xlu0 %469
    %v471 = vrcp.pop %v467
    %v472 = vmul.f32 %v462, %v471
    %v473 = vrcp.pop %v470
    %v474 = vmul.f32 %v464, %v473
    %v475 = vpack.c.bf16 %v472, %v472
    %v476 = vpack.c.bf16 %v474, %v474
    %477 = vrot.lane.b32.xlu0 %v133, 56
    %v478 = vpop.permute.xlu0 %477
    %v480 = vsel %vm137, %v475, 0
    %v483 = vsel %vm261, %v478, 0
    %485 = vmatprep.subr.bf16.mxu0 0
    %486 = vmatpush1.bf16.msra.mxu0 %v483
    %487 = vmatprep.subr.bf16.mxu0 0
    %488 = vmatpush1.bf16.msra.mxu0 0
    %489 = vmatprep.subr.bf16.mxu0 0
    %490 = vmatpush1.bf16.msra.mxu0 0
    %491 = vmatprep.subr.bf16.mxu0 0
    %492 = vmatpush1.bf16.msra.mxu0 0
    %493 = vmatprep.subr.bf16.mxu0 0
    %494 = vmatpush1.bf16.msra.mxu0 0
    %495 = vmatprep.subr.bf16.mxu0 0
    %496 = vmatpush1.bf16.msra.mxu0 0
    %497 = vmatprep.subr.bf16.mxu0 0
    %498 = vmatpush1.bf16.msra.mxu0 0
    %499 = vmatprep.subr.bf16.mxu0 0
    %500 = vmatpush1.bf16.msra.mxu0 0
    %501 = vmatprep.subr.bf16.mxu0 0
    %502 = vmatpush1.bf16.msra.mxu0 0
    %503 = vmatprep.subr.bf16.mxu0 0
    %504 = vmatpush1.bf16.msra.mxu0 0
    %505 = vmatprep.subr.bf16.mxu0 0
    %506 = vmatpush1.bf16.msra.mxu0 0
    %507 = vmatprep.subr.bf16.mxu0 0
    %508 = vmatpush1.bf16.msra.mxu0 0
    %509 = vmatprep.subr.bf16.mxu0 0
    %510 = vmatpush1.bf16.msra.mxu0 0
    %511 = vmatprep.subr.bf16.mxu0 0
    %512 = vmatpush1.bf16.msra.mxu0 0
    %513 = vmatprep.subr.bf16.mxu0 0
    %514 = vmatpush1.bf16.msra.mxu0 0
    %515 = vmatprep.subr.bf16.mxu0 0
    %516 = vmatpush1.bf16.msra.mxu0 0
    %517 = vmatprep.mubr.bf16.mxu0 0
    %518 = vmatmul.mubr.bf16.gmra.mrb[0].mxu0 %v480
    %v519 = vpop.f32.mrb[0].mxu0
    %v520 = vadd.f32 0.0, %v519
    %v521 = vpop.f32.mrb[0].mxu0
    %v522 = vpop.f32.mrb[0].mxu0
    %v523 = vpop.f32.mrb[0].mxu0
    %524 = vdwg.mxu0
    %525 = vrot.lane.b32.xlu0 %v134, 56
    %v526 = vpop.permute.xlu0 %525
    %v528 = vsel %vm137, %v476, 0
    %v531 = vsel %vm261, %v526, 0
    %533 = vmatprep.subr.bf16.mxu0 0
    %534 = vmatpush1.bf16.msra.mxu0 %v531
    %535 = vmatprep.subr.bf16.mxu0 0
    %536 = vmatpush1.bf16.msra.mxu0 0
    %537 = vmatprep.subr.bf16.mxu0 0
    %538 = vmatpush1.bf16.msra.mxu0 0
    %539 = vmatprep.subr.bf16.mxu0 0
    %540 = vmatpush1.bf16.msra.mxu0 0
    %541 = vmatprep.subr.bf16.mxu0 0
    %542 = vmatpush1.bf16.msra.mxu0 0
    %543 = vmatprep.subr.bf16.mxu0 0
    %544 = vmatpush1.bf16.msra.mxu0 0
    %545 = vmatprep.subr.bf16.mxu0 0
    %546 = vmatpush1.bf16.msra.mxu0 0
    %547 = vmatprep.subr.bf16.mxu0 0
    %548 = vmatpush1.bf16.msra.mxu0 0
    %549 = vmatprep.subr.bf16.mxu0 0
    %550 = vmatpush1.bf16.msra.mxu0 0
    %551 = vmatprep.subr.bf16.mxu0 0
    %552 = vmatpush1.bf16.msra.mxu0 0
    %553 = vmatprep.subr.bf16.mxu0 0
    %554 = vmatpush1.bf16.msra.mxu0 0
    %555 = vmatprep.subr.bf16.mxu0 0
    %556 = vmatpush1.bf16.msra.mxu0 0
    %557 = vmatprep.subr.bf16.mxu0 0
    %558 = vmatpush1.bf16.msra.mxu0 0
    %559 = vmatprep.subr.bf16.mxu0 0
    %560 = vmatpush1.bf16.msra.mxu0 0
    %561 = vmatprep.subr.bf16.mxu0 0
    %562 = vmatpush1.bf16.msra.mxu0 0
    %563 = vmatprep.subr.bf16.mxu0 0
    %564 = vmatpush1.bf16.msra.mxu0 0
    %565 = vmatprep.mubr.bf16.mxu0 0
    %566 = vmatmul.mubr.bf16.gmra.mrb[0].mxu0 %v528
    %v567 = vpop.f32.mrb[0].mxu0
    %v568 = vadd.f32 0.0, %v567
    %v569 = vpop.f32.mrb[0].mxu0
    %v570 = vpop.f32.mrb[0].mxu0
    %v571 = vpop.f32.mrb[0].mxu0
    %572 = vdwg.mxu0
    %573 = vrot.lane.b32.xlu0 %v133, 112
    %v574 = vpop.permute.xlu0 %573
    %575 = vrot.lane.b32.xlu0 %v133, 80
    %v576 = vpop.permute.xlu0 %575
    %v578 = vsel %vm137, %v574, 0
    %v581 = vsel %vm137, %v576, 0
    %583 = vmatprep.subr.bf16.mxu0 0
    %584 = vmatpush1.bf16.xpose.msra.mxu0 %v581
    %585 = vmatprep.subr.bf16.mxu0 0
    %586 = vmatpush1.bf16.xpose.msra.mxu0 0
    %587 = vmatprep.subr.bf16.mxu0 0
    %588 = vmatpush1.bf16.xpose.msra.mxu0 0
    %589 = vmatprep.subr.bf16.mxu0 0
    %590 = vmatpush1.bf16.xpose.msra.mxu0 0
    %591 = vmatprep.subr.bf16.mxu0 0
    %592 = vmatpush1.bf16.xpose.msra.mxu0 0
    %593 = vmatprep.subr.bf16.mxu0 0
    %594 = vmatpush1.bf16.xpose.msra.mxu0 0
    %595 = vmatprep.subr.bf16.mxu0 0
    %596 = vmatpush1.bf16.xpose.msra.mxu0 0
    %597 = vmatprep.subr.bf16.mxu0 0
    %598 = vmatpush1.bf16.xpose.msra.mxu0 0
    %599 = vmatprep.subr.bf16.mxu0 0
    %600 = vmatpush1.bf16.xpose.msra.mxu0 0
    %601 = vmatprep.subr.bf16.mxu0 0
    %602 = vmatpush1.bf16.xpose.msra.mxu0 0
    %603 = vmatprep.subr.bf16.mxu0 0
    %604 = vmatpush1.bf16.xpose.msra.mxu0 0
    %605 = vmatprep.subr.bf16.mxu0 0
    %606 = vmatpush1.bf16.xpose.msra.mxu0 0
    %607 = vmatprep.subr.bf16.mxu0 0
    %608 = vmatpush1.bf16.xpose.msra.mxu0 0
    %609 = vmatprep.subr.bf16.mxu0 0
    %610 = vmatpush1.bf16.xpose.msra.mxu0 0
    %611 = vmatprep.subr.bf16.mxu0 0
    %612 = vmatpush1.bf16.xpose.msra.mxu0 0
    %613 = vmatprep.subr.bf16.mxu0 0
    %614 = vmatpush1.bf16.xpose.msra.mxu0 0
    %615 = vmatprep.mubr.bf16.mxu0 0
    %616 = vmatmul.mubr.bf16.gmra.mrb[0].mxu0 %v578
    %v617 = vpop.f32.mrb[0].mxu0
    %v618 = vadd.f32 0.0, %v617
    %v619 = vpop.f32.mrb[0].mxu0
    %v620 = vpop.f32.mrb[0].mxu0
    %v621 = vpop.f32.mrb[0].mxu0
    %622 = vdwg.mxu0
    %623 = vrot.lane.b32.xlu0 %v134, 112
    %v624 = vpop.permute.xlu0 %623
    %625 = vrot.lane.b32.xlu0 %v134, 80
    %v626 = vpop.permute.xlu0 %625
    %v628 = vsel %vm137, %v624, 0
    %v631 = vsel %vm137, %v626, 0
    %633 = vmatprep.subr.bf16.mxu0 0
    %634 = vmatpush1.bf16.xpose.msra.mxu0 %v631
    %635 = vmatprep.subr.bf16.mxu0 0
    %636 = vmatpush1.bf16.xpose.msra.mxu0 0
    %637 = vmatprep.subr.bf16.mxu0 0
    %638 = vmatpush1.bf16.xpose.msra.mxu0 0
    %639 = vmatprep.subr.bf16.mxu0 0
    %640 = vmatpush1.bf16.xpose.msra.mxu0 0
    %641 = vmatprep.subr.bf16.mxu0 0
    %642 = vmatpush1.bf16.xpose.msra.mxu0 0
    %643 = vmatprep.subr.bf16.mxu0 0
    %644 = vmatpush1.bf16.xpose.msra.mxu0 0
    %645 = vmatprep.subr.bf16.mxu0 0
    %646 = vmatpush1.bf16.xpose.msra.mxu0 0
    %647 = vmatprep.subr.bf16.mxu0 0
    %648 = vmatpush1.bf16.xpose.msra.mxu0 0
    %649 = vmatprep.subr.bf16.mxu0 0
    %650 = vmatpush1.bf16.xpose.msra.mxu0 0
    %651 = vmatprep.subr.bf16.mxu0 0
    %652 = vmatpush1.bf16.xpose.msra.mxu0 0
    %653 = vmatprep.subr.bf16.mxu0 0
    %654 = vmatpush1.bf16.xpose.msra.mxu0 0
    %655 = vmatprep.subr.bf16.mxu0 0
    %656 = vmatpush1.bf16.xpose.msra.mxu0 0
    %657 = vmatprep.subr.bf16.mxu0 0
    %658 = vmatpush1.bf16.xpose.msra.mxu0 0
    %659 = vmatprep.subr.bf16.mxu0 0
    %660 = vmatpush1.bf16.xpose.msra.mxu0 0
    %661 = vmatprep.subr.bf16.mxu0 0
    %662 = vmatpush1.bf16.xpose.msra.mxu0 0
    %663 = vmatprep.subr.bf16.mxu0 0
    %664 = vmatpush1.bf16.xpose.msra.mxu0 0
    %665 = vmatprep.mubr.bf16.mxu0 0
    %666 = vmatmul.mubr.bf16.gmra.mrb[0].mxu0 %v628
    %v667 = vpop.f32.mrb[0].mxu0
    %v668 = vadd.f32 0.0, %v667
    %v669 = vpop.f32.mrb[0].mxu0
    %v670 = vpop.f32.mrb[0].mxu0
    %v671 = vpop.f32.mrb[0].mxu0
    %672 = vdwg.mxu0
    %v673 = vsel %vm137, %v618, -inf
    %674 = vmax.xlane.f32.xlu0 %v673
    %v675 = vpop.xlane.xlu0 %674
    %v676 = vsel %vm137, %v668, -inf
    %677 = vmax.xlane.f32.xlu0 %v676
    %v678 = vpop.xlane.xlu0 %677
    %v679 = vsub.f32 %v618, %v675
    %v680 = vsub.f32 %v668, %v678
    %v681 = vmul.f32 %v679, 1.442695
    %v682 = vpow.pop %v681
    %v683 = vmul.f32 %v680, 1.442695
    %v684 = vpow.pop %v683
    %v685 = vsel %vm137, %v682, 0.0
    %686 = vadd.xlane.f32.xlu0 %v685
    %v687 = vpop.xlane.xlu0 %686
    %v688 = vsel %vm137, %v684, 0.0
    %689 = vadd.xlane.f32.xlu0 %v688
    %v690 = vpop.xlane.xlu0 %689
    %v691 = vrcp.pop %v687
    %v692 = vmul.f32 %v682, %v691
    %v693 = vrcp.pop %v690
    %v694 = vmul.f32 %v684, %v693
    %v695 = vpack.c.bf16 %v692, %v692
    %v696 = vpack.c.bf16 %v694, %v694
    %697 = vrot.lane.b32.xlu0 %v133, 48
    %v698 = vpop.permute.xlu0 %697
    %v700 = vsel %vm137, %v695, 0
    %v703 = vsel %vm261, %v698, 0
    %705 = vmatprep.subr.bf16.mxu0 0
    %706 = vmatpush1.bf16.msra.mxu0 %v703
    %707 = vmatprep.subr.bf16.mxu0 0
    %708 = vmatpush1.bf16.msra.mxu0 0
    %709 = vmatprep.subr.bf16.mxu0 0
    %710 = vmatpush1.bf16.msra.mxu0 0
    %711 = vmatprep.subr.bf16.mxu0 0
    %712 = vmatpush1.bf16.msra.mxu0 0
    %713 = vmatprep.subr.bf16.mxu0 0
    %714 = vmatpush1.bf16.msra.mxu0 0
    %715 = vmatprep.subr.bf16.mxu0 0
    %716 = vmatpush1.bf16.msra.mxu0 0
    %717 = vmatprep.subr.bf16.mxu0 0
    %718 = vmatpush1.bf16.msra.mxu0 0
    %719 = vmatprep.subr.bf16.mxu0 0
    %720 = vmatpush1.bf16.msra.mxu0 0
    %721 = vmatprep.subr.bf16.mxu0 0
    %722 = vmatpush1.bf16.msra.mxu0 0
    %723 = vmatprep.subr.bf16.mxu0 0
    %724 = vmatpush1.bf16.msra.mxu0 0
    %725 = vmatprep.subr.bf16.mxu0 0
    %726 = vmatpush1.bf16.msra.mxu0 0
    %727 = vmatprep.subr.bf16.mxu0 0
    %728 = vmatpush1.bf16.msra.mxu0 0
    %729 = vmatprep.subr.bf16.mxu0 0
    %730 = vmatpush1.bf16.msra.mxu0 0
    %731 = vmatprep.subr.bf16.mxu0 0
    %732 = vmatpush1.bf16.msra.mxu0 0
    %733 = vmatprep.subr.bf16.mxu0 0
    %734 = vmatpush1.bf16.msra.mxu0 0
    %735 = vmatprep.subr.bf16.mxu0 0
    %736 = vmatpush1.bf16.msra.mxu0 0
    %737 = vmatprep.mubr.bf16.mxu0 0
    %738 = vmatmul.mubr.bf16.gmra.mrb[0].mxu0 %v700
    %v739 = vpop.f32.mrb[0].mxu0
    %v740 = vadd.f32 0.0, %v739
    %v741 = vpop.f32.mrb[0].mxu0
    %v742 = vpop.f32.mrb[0].mxu0
    %v743 = vpop.f32.mrb[0].mxu0
    %744 = vdwg.mxu0
    %745 = vrot.lane.b32.xlu0 %v134, 48
    %v746 = vpop.permute.xlu0 %745
    %v748 = vsel %vm137, %v696, 0
    %v751 = vsel %vm261, %v746, 0
    %753 = vmatprep.subr.bf16.mxu0 0
    %754 = vmatpush1.bf16.msra.mxu0 %v751
    %755 = vmatprep.subr.bf16.mxu0 0
    %756 = vmatpush1.bf16.msra.mxu0 0
    %757 = vmatprep.subr.bf16.mxu0 0
    %758 = vmatpush1.bf16.msra.mxu0 0
    %759 = vmatprep.subr.bf16.mxu0 0
    %760 = vmatpush1.bf16.msra.mxu0 0
    %761 = vmatprep.subr.bf16.mxu0 0
    %762 = vmatpush1.bf16.msra.mxu0 0
    %763 = vmatprep.subr.bf16.mxu0 0
    %764 = vmatpush1.bf16.msra.mxu0 0
    %765 = vmatprep.subr.bf16.mxu0 0
    %766 = vmatpush1.bf16.msra.mxu0 0
    %767 = vmatprep.subr.bf16.mxu0 0
    %768 = vmatpush1.bf16.msra.mxu0 0
    %769 = vmatprep.subr.bf16.mxu0 0
    %770 = vmatpush1.bf16.msra.mxu0 0
    %771 = vmatprep.subr.bf16.mxu0 0
    %772 = vmatpush1.bf16.msra.mxu0 0
    %773 = vmatprep.subr.bf16.mxu0 0
    %774 = vmatpush1.bf16.msra.mxu0 0
    %775 = vmatprep.subr.bf16.mxu0 0
    %776 = vmatpush1.bf16.msra.mxu0 0
    %777 = vmatprep.subr.bf16.mxu0 0
    %778 = vmatpush1.bf16.msra.mxu0 0
    %779 = vmatprep.subr.bf16.mxu0 0
    %780 = vmatpush1.bf16.msra.mxu0 0
    %781 = vmatprep.subr.bf16.mxu0 0
    %782 = vmatpush1.bf16.msra.mxu0 0
    %783 = vmatprep.subr.bf16.mxu0 0
    %784 = vmatpush1.bf16.msra.mxu0 0
    %785 = vmatprep.mubr.bf16.mxu0 0
    %786 = vmatmul.mubr.bf16.gmra.mrb[0].mxu0 %v748
    %v787 = vpop.f32.mrb[0].mxu0
    %v788 = vadd.f32 0.0, %v787
    %v789 = vpop.f32.mrb[0].mxu0
    %v790 = vpop.f32.mrb[0].mxu0
    %v791 = vpop.f32.mrb[0].mxu0
    %792 = vdwg.mxu0
    %793 = vrot.lane.b32.xlu0 %v133, 104
    %v794 = vpop.permute.xlu0 %793
    %795 = vrot.lane.b32.xlu0 %v133, 72
    %v796 = vpop.permute.xlu0 %795
    %v798 = vsel %vm137, %v794, 0
    %v801 = vsel %vm137, %v796, 0
    %803 = vmatprep.subr.bf16.mxu0 0
    %804 = vmatpush1.bf16.xpose.msra.mxu0 %v801
    %805 = vmatprep.subr.bf16.mxu0 0
    %806 = vmatpush1.bf16.xpose.msra.mxu0 0
    %807 = vmatprep.subr.bf16.mxu0 0
    %808 = vmatpush1.bf16.xpose.msra.mxu0 0
    %809 = vmatprep.subr.bf16.mxu0 0
    %810 = vmatpush1.bf16.xpose.msra.mxu0 0
    %811 = vmatprep.subr.bf16.mxu0 0
    %812 = vmatpush1.bf16.xpose.msra.mxu0 0
    %813 = vmatprep.subr.bf16.mxu0 0
    %814 = vmatpush1.bf16.xpose.msra.mxu0 0
    %815 = vmatprep.subr.bf16.mxu0 0
    %816 = vmatpush1.bf16.xpose.msra.mxu0 0
    %817 = vmatprep.subr.bf16.mxu0 0
    %818 = vmatpush1.bf16.xpose.msra.mxu0 0
    %819 = vmatprep.subr.bf16.mxu0 0
    %820 = vmatpush1.bf16.xpose.msra.mxu0 0
    %821 = vmatprep.subr.bf16.mxu0 0
    %822 = vmatpush1.bf16.xpose.msra.mxu0 0
    %823 = vmatprep.subr.bf16.mxu0 0
    %824 = vmatpush1.bf16.xpose.msra.mxu0 0
    %825 = vmatprep.subr.bf16.mxu0 0
    %826 = vmatpush1.bf16.xpose.msra.mxu0 0
    %827 = vmatprep.subr.bf16.mxu0 0
    %828 = vmatpush1.bf16.xpose.msra.mxu0 0
    %829 = vmatprep.subr.bf16.mxu0 0
    %830 = vmatpush1.bf16.xpose.msra.mxu0 0
    %831 = vmatprep.subr.bf16.mxu0 0
    %832 = vmatpush1.bf16.xpose.msra.mxu0 0
    %833 = vmatprep.subr.bf16.mxu0 0
    %834 = vmatpush1.bf16.xpose.msra.mxu0 0
    %835 = vmatprep.mubr.bf16.mxu0 0
    %836 = vmatmul.mubr.bf16.gmra.mrb[0].mxu0 %v798
    %v837 = vpop.f32.mrb[0].mxu0
    %v838 = vadd.f32 0.0, %v837
    %v839 = vpop.f32.mrb[0].mxu0
    %v840 = vpop.f32.mrb[0].mxu0
    %v841 = vpop.f32.mrb[0].mxu0
    %842 = vdwg.mxu0
    %843 = vrot.lane.b32.xlu0 %v134, 104
    %v844 = vpop.permute.xlu0 %843
    %845 = vrot.lane.b32.xlu0 %v134, 72
    %v846 = vpop.permute.xlu0 %845
    %v848 = vsel %vm137, %v844, 0
    %v851 = vsel %vm137, %v846, 0
    %853 = vmatprep.subr.bf16.mxu0 0
    %854 = vmatpush1.bf16.xpose.msra.mxu0 %v851
    %855 = vmatprep.subr.bf16.mxu0 0
    %856 = vmatpush1.bf16.xpose.msra.mxu0 0
    %857 = vmatprep.subr.bf16.mxu0 0
    %858 = vmatpush1.bf16.xpose.msra.mxu0 0
    %859 = vmatprep.subr.bf16.mxu0 0
    %860 = vmatpush1.bf16.xpose.msra.mxu0 0
    %861 = vmatprep.subr.bf16.mxu0 0
    %862 = vmatpush1.bf16.xpose.msra.mxu0 0
    %863 = vmatprep.subr.bf16.mxu0 0
    %864 = vmatpush1.bf16.xpose.msra.mxu0 0
    %865 = vmatprep.subr.bf16.mxu0 0
    %866 = vmatpush1.bf16.xpose.msra.mxu0 0
    %867 = vmatprep.subr.bf16.mxu0 0
    %868 = vmatpush1.bf16.xpose.msra.mxu0 0
    %869 = vmatprep.subr.bf16.mxu0 0
    %870 = vmatpush1.bf16.xpose.msra.mxu0 0
    %871 = vmatprep.subr.bf16.mxu0 0
    %872 = vmatpush1.bf16.xpose.msra.mxu0 0
    %873 = vmatprep.subr.bf16.mxu0 0
    %874 = vmatpush1.bf16.xpose.msra.mxu0 0
    %875 = vmatprep.subr.bf16.mxu0 0
    %876 = vmatpush1.bf16.xpose.msra.mxu0 0
    %877 = vmatprep.subr.bf16.mxu0 0
    %878 = vmatpush1.bf16.xpose.msra.mxu0 0
    %879 = vmatprep.subr.bf16.mxu0 0
    %880 = vmatpush1.bf16.xpose.msra.mxu0 0
    %881 = vmatprep.subr.bf16.mxu0 0
    %882 = vmatpush1.bf16.xpose.msra.mxu0 0
    %883 = vmatprep.subr.bf16.mxu0 0
    %884 = vmatpush1.bf16.xpose.msra.mxu0 0
    %885 = vmatprep.mubr.bf16.mxu0 0
    %886 = vmatmul.mubr.bf16.gmra.mrb[0].mxu0 %v848
    %v887 = vpop.f32.mrb[0].mxu0
    %v888 = vadd.f32 0.0, %v887
    %v889 = vpop.f32.mrb[0].mxu0
    %v890 = vpop.f32.mrb[0].mxu0
    %v891 = vpop.f32.mrb[0].mxu0
    %892 = vdwg.mxu0
    %v893 = vsel %vm137, %v838, -inf
    %894 = vmax.xlane.f32.xlu0 %v893
    %v895 = vpop.xlane.xlu0 %894
    %v896 = vsel %vm137, %v888, -inf
    %897 = vmax.xlane.f32.xlu0 %v896
    %v898 = vpop.xlane.xlu0 %897
    %v899 = vsub.f32 %v838, %v895
    %v900 = vsub.f32 %v888, %v898
    %v901 = vmul.f32 %v899, 1.442695
    %v902 = vpow.pop %v901
    %v903 = vmul.f32 %v900, 1.442695
    %v904 = vpow.pop %v903
    %v905 = vsel %vm137, %v902, 0.0
    %906 = vadd.xlane.f32.xlu0 %v905
    %v907 = vpop.xlane.xlu0 %906
    %v908 = vsel %vm137, %v904, 0.0
    %909 = vadd.xlane.f32.xlu0 %v908
    %v910 = vpop.xlane.xlu0 %909
    %v911 = vrcp.pop %v907
    %v912 = vmul.f32 %v902, %v911
    %v913 = vrcp.pop %v910
    %v914 = vmul.f32 %v904, %v913
    %v915 = vpack.c.bf16 %v912, %v912
    %v916 = vpack.c.bf16 %v914, %v914
    %917 = vrot.lane.b32.xlu0 %v133, 40
    %v918 = vpop.permute.xlu0 %917
    %v920 = vsel %vm137, %v915, 0
    %v923 = vsel %vm261, %v918, 0
    %925 = vmatprep.subr.bf16.mxu0 0
    %926 = vmatpush1.bf16.msra.mxu0 %v923
    %927 = vmatprep.subr.bf16.mxu0 0
    %928 = vmatpush1.bf16.msra.mxu0 0
    %929 = vmatprep.subr.bf16.mxu0 0
    %930 = vmatpush1.bf16.msra.mxu0 0
    %931 = vmatprep.subr.bf16.mxu0 0
    %932 = vmatpush1.bf16.msra.mxu0 0
    %933 = vmatprep.subr.bf16.mxu0 0
    %934 = vmatpush1.bf16.msra.mxu0 0
    %935 = vmatprep.subr.bf16.mxu0 0
    %936 = vmatpush1.bf16.msra.mxu0 0
    %937 = vmatprep.subr.bf16.mxu0 0
    %938 = vmatpush1.bf16.msra.mxu0 0
    %939 = vmatprep.subr.bf16.mxu0 0
    %940 = vmatpush1.bf16.msra.mxu0 0
    %941 = vmatprep.subr.bf16.mxu0 0
    %942 = vmatpush1.bf16.msra.mxu0 0
    %943 = vmatprep.subr.bf16.mxu0 0
    %944 = vmatpush1.bf16.msra.mxu0 0
    %945 = vmatprep.subr.bf16.mxu0 0
    %946 = vmatpush1.bf16.msra.mxu0 0
    %947 = vmatprep.subr.bf16.mxu0 0
    %948 = vmatpush1.bf16.msra.mxu0 0
    %949 = vmatprep.subr.bf16.mxu0 0
    %950 = vmatpush1.bf16.msra.mxu0 0
    %951 = vmatprep.subr.bf16.mxu0 0
    %952 = vmatpush1.bf16.msra.mxu0 0
    %953 = vmatprep.subr.bf16.mxu0 0
    %954 = vmatpush1.bf16.msra.mxu0 0
    %955 = vmatprep.subr.bf16.mxu0 0
    %956 = vmatpush1.bf16.msra.mxu0 0
    %957 = vmatprep.mubr.bf16.mxu0 0
    %958 = vmatmul.mubr.bf16.gmra.mrb[0].mxu0 %v920
    %v959 = vpop.f32.mrb[0].mxu0
    %v960 = vadd.f32 0.0, %v959
    %v961 = vpop.f32.mrb[0].mxu0
    %v962 = vpop.f32.mrb[0].mxu0
    %v963 = vpop.f32.mrb[0].mxu0
    %964 = vdwg.mxu0
    %965 = vrot.lane.b32.xlu0 %v134, 40
    %v966 = vpop.permute.xlu0 %965
    %v968 = vsel %vm137, %v916, 0
    %v971 = vsel %vm261, %v966, 0
    %973 = vmatprep.subr.bf16.mxu0 0
    %974 = vmatpush1.bf16.msra.mxu0 %v971
    %975 = vmatprep.subr.bf16.mxu0 0
    %976 = vmatpush1.bf16.msra.mxu0 0
    %977 = vmatprep.subr.bf16.mxu0 0
    %978 = vmatpush1.bf16.msra.mxu0 0
    %979 = vmatprep.subr.bf16.mxu0 0
    %980 = vmatpush1.bf16.msra.mxu0 0
    %981 = vmatprep.subr.bf16.mxu0 0
    %982 = vmatpush1.bf16.msra.mxu0 0
    %983 = vmatprep.subr.bf16.mxu0 0
    %984 = vmatpush1.bf16.msra.mxu0 0
    %985 = vmatprep.subr.bf16.mxu0 0
    %986 = vmatpush1.bf16.msra.mxu0 0
    %987 = vmatprep.subr.bf16.mxu0 0
    %988 = vmatpush1.bf16.msra.mxu0 0
    %989 = vmatprep.subr.bf16.mxu0 0
    %990 = vmatpush1.bf16.msra.mxu0 0
    %991 = vmatprep.subr.bf16.mxu0 0
    %992 = vmatpush1.bf16.msra.mxu0 0
    %993 = vmatprep.subr.bf16.mxu0 0
    %994 = vmatpush1.bf16.msra.mxu0 0
    %995 = vmatprep.subr.bf16.mxu0 0
    %996 = vmatpush1.bf16.msra.mxu0 0
    %997 = vmatprep.subr.bf16.mxu0 0
    %998 = vmatpush1.bf16.msra.mxu0 0
    %999 = vmatprep.subr.bf16.mxu0 0
    %1000 = vmatpush1.bf16.msra.mxu0 0
    %1001 = vmatprep.subr.bf16.mxu0 0
    %1002 = vmatpush1.bf16.msra.mxu0 0
    %1003 = vmatprep.subr.bf16.mxu0 0
    %1004 = vmatpush1.bf16.msra.mxu0 0
    %1005 = vmatprep.mubr.bf16.mxu0 0
    %1006 = vmatmul.mubr.bf16.gmra.mrb[0].mxu0 %v968
    %v1007 = vpop.f32.mrb[0].mxu0
    %v1008 = vadd.f32 0.0, %v1007
    %v1009 = vpop.f32.mrb[0].mxu0
    %v1010 = vpop.f32.mrb[0].mxu0
    %v1011 = vpop.f32.mrb[0].mxu0
    %1012 = vdwg.mxu0
    %1015 = vrot.lane.b32.xlu0 %v520, 8
    %v1016 = vpop.permute.xlu0 %1015
    %1017 = vrot.lane.b32.xlu0 %v568, 8
    %v1018 = vpop.permute.xlu0 %1017
    %1023 = vrot.lane.b32.xlu0 %v740, 16
    %v1024 = vpop.permute.xlu0 %1023
    %1025 = vrot.lane.b32.xlu0 %v788, 16
    %v1026 = vpop.permute.xlu0 %1025
    %1031 = vrot.lane.b32.xlu0 %v960, 24
    %v1032 = vpop.permute.xlu0 %1031
    %1033 = vrot.lane.b32.xlu0 %v1008, 24
    %v1034 = vpop.permute.xlu0 %1033
    %v1037 = vsel %vm137, %v300, %v1016
    %v1038 = vsel %vm137, %v348, %v1018
    %vm1039 = vcmask 130048
    %v1040 = vsel %vm1039, %v1037, %v1024
    %v1041 = vsel %vm1039, %v1038, %v1026
    %vm1042 = vcmask 195584
    %v1043 = vsel %vm1042, %v1040, %v1032
    %v1044 = vsel %vm1042, %v1041, %v1034
    %v1045 = vpack.c.bf16 %v1044, %v1043
    %v1046 = vld [vmem:[%s3] sm:$0xf]
    %v1047 = vld [vmem:[%s3 + $0x4] sm:$0xf]
    %v1048 = vld [vmem:[%s3 + $0x8] sm:$0xf]
    %v1049 = vld [vmem:[%s3 + $0xc] sm:$0xf]
    %v1050 = vlaneseq
    %v1051 = vshrl.u32 %v1050, 7
    %v1052 = vsub.s32 2, %v1051
    %v1053 = vrot.slane %v27, %v1052
    %v1058 = vunpack.c.l.b16 %v1046
    %v1059 = vunpack.c.l.b16 %v1047
    %v1060 = vunpack.c.l.b16 %v1048
    %v1061 = vunpack.c.l.b16 %v1049
    %v1062 = vpack.c.b16 %v1059, %v1058
    %v1063 = vpack.c.b16 %v1061, %v1060
    %v1067 = vsel %vm28, %v1045, 0
    %1069 = vmatprep.subr.bf16.mxu0 0
    %1070 = vmatpush1.bf16.msra.mxu0 %v1062
    %1071 = vmatprep.subr.bf16.mxu0 0
    %1072 = vmatpush1.bf16.msra.mxu0 %v1063
    %1073 = vmatprep.subr.bf16.mxu0 0
    %1074 = vmatpush1.bf16.msra.mxu0 0
    %1075 = vmatprep.subr.bf16.mxu0 0
    %1076 = vmatpush1.bf16.msra.mxu0 0
    %1077 = vmatprep.subr.bf16.mxu0 0
    %1078 = vmatpush1.bf16.msra.mxu0 0
    %1079 = vmatprep.subr.bf16.mxu0 0
    %1080 = vmatpush1.bf16.msra.mxu0 0
    %1081 = vmatprep.subr.bf16.mxu0 0
    %1082 = vmatpush1.bf16.msra.mxu0 0
    %1083 = vmatprep.subr.bf16.mxu0 0
    %1084 = vmatpush1.bf16.msra.mxu0 0
    %1085 = vmatprep.subr.bf16.mxu0 0
    %1086 = vmatpush1.bf16.msra.mxu0 0
    %1087 = vmatprep.subr.bf16.mxu0 0
    %1088 = vmatpush1.bf16.msra.mxu0 0
    %1089 = vmatprep.subr.bf16.mxu0 0
    %1090 = vmatpush1.bf16.msra.mxu0 0
    %1091 = vmatprep.subr.bf16.mxu0 0
    %1092 = vmatpush1.bf16.msra.mxu0 0
    %1093 = vmatprep.subr.bf16.mxu0 0
    %1094 = vmatpush1.bf16.msra.mxu0 0
    %1095 = vmatprep.subr.bf16.mxu0 0
    %1096 = vmatpush1.bf16.msra.mxu0 0
    %1097 = vmatprep.subr.bf16.mxu0 0
    %1098 = vmatpush1.bf16.msra.mxu0 0
    %1099 = vmatprep.subr.bf16.mxu0 0
    %1100 = vmatpush1.bf16.msra.mxu0 0
    %1101 = vmatprep.mubr.bf16.mxu0 0
    %1102 = vmatmul.mubr.bf16.gmra.mrb[0].mxu0 %v1067
    %v1103 = vpop.f32.mrb[0].mxu0
    %v1104 = vadd.f32 %v1053, %v1103
    %v1105 = vpop.f32.mrb[0].mxu0
    %v1106 = vpop.f32.mrb[0].mxu0
    %v1107 = vadd.f32 %v1053, %v1106
    %v1108 = vpop.f32.mrb[0].mxu0
    %1109 = vdwg.mxu0
    %v1110 = vadd.f32 %v25, %v1104
    %v1111 = vadd.f32 %v26, %v1107
    %v1112 = vsel %vm28, %v1110, 0.0
    %1113 = vadd.xlane.f32.xlu0 %v1112
    %v1114 = vpop.xlane.xlu0 %1113
    %v1115 = vsel %vm28, %v1111, 0.0
    %1116 = vadd.xlane.f32.xlu0 %v1115
    %v1117 = vpop.xlane.xlu0 %1116
    %v1118 = vmul.f32 %v1114, %v35
    %v1119 = vmul.f32 %v1117, %v35
    %v1120 = vsub.f32 %v1110, %v1118
    %v1121 = vsub.f32 %v1111, %v1119
    %v1122 = vmul.f32 %v1120, %v1120
    %v1123 = vmul.f32 %v1121, %v1121
    %v1124 = vsel %vm28, %v1122, 0.0
    %1125 = vadd.xlane.f32.xlu0 %v1124
    %v1126 = vpop.xlane.xlu0 %1125
    %v1127 = vsel %vm28, %v1123, 0.0
    %1128 = vadd.xlane.f32.xlu0 %v1127
    %v1129 = vpop.xlane.xlu0 %1128
    %v1130 = vmul.f32 %v1126, %v35
    %v1131 = vmul.f32 %v1129, %v35
    %v1132 = vadd.f32 %v1130, 1e-05
    %v1133 = vadd.f32 %v1131, 1e-05
    %v1134 = vrsqrt.pop %v1132
    %v1135 = vrsqrt.pop %v1133
    %v1136 = vmul.f32 %v1120, %v1134
    %v1137 = vmul.f32 %v1121, %v1135
    %v1138 = vlaneseq
    %v1139 = vshrl.u32 %v1138, 7
    %v1140 = vsub.s32 3, %v1139
    %v1141 = vrot.slane %v27, %v1140
    %v1142 = vmul.f32 %v1136, %v1141
    %v1143 = vmul.f32 %v1137, %v1141
    %v1144 = vlaneseq
    %v1145 = vshrl.u32 %v1144, 7
    %v1146 = vsub.s32 4, %v1145
    %v1147 = vrot.slane %v27, %v1146
    %v1148 = vadd.f32 %v1142, %v1147
    %v1149 = vadd.f32 %v1143, %v1147
    %v1150 = vpack.c.bf16 %v1149, %v1148
    %v1151 = vld [vmem:[%s4] sm:$0xf]
    %v1152 = vld [vmem:[%s4 + $0x4] sm:$0xf]
    %v1153 = vld [vmem:[%s4 + $0x8] sm:$0xf]
    %v1154 = vld [vmem:[%s4 + $0xc] sm:$0xf]
    %v1155 = vlaneseq
    %v1156 = vshrl.u32 %v1155, 7
    %v1157 = vsub.s32 5, %v1156
    %v1158 = vrot.slane %v27, %v1157
    %v1163 = vunpack.c.l.b16 %v1151
    %v1164 = vunpack.c.l.b16 %v1152
    %v1165 = vunpack.c.l.b16 %v1153
    %v1166 = vunpack.c.l.b16 %v1154
    %v1167 = vpack.c.b16 %v1164, %v1163
    %v1168 = vpack.c.b16 %v1166, %v1165
    %v1172 = vsel %vm28, %v1150, 0
    %1174 = vmatprep.subr.bf16.mxu0 0
    %1175 = vmatpush1.bf16.msra.mxu0 %v1167
    %1176 = vmatprep.subr.bf16.mxu0 0
    %1177 = vmatpush1.bf16.msra.mxu0 %v1168
    %1178 = vmatprep.subr.bf16.mxu0 0
    %1179 = vmatpush1.bf16.msra.mxu0 0
    %1180 = vmatprep.subr.bf16.mxu0 0
    %1181 = vmatpush1.bf16.msra.mxu0 0
    %1182 = vmatprep.subr.bf16.mxu0 0
    %1183 = vmatpush1.bf16.msra.mxu0 0
    %1184 = vmatprep.subr.bf16.mxu0 0
    %1185 = vmatpush1.bf16.msra.mxu0 0
    %1186 = vmatprep.subr.bf16.mxu0 0
    %1187 = vmatpush1.bf16.msra.mxu0 0
    %1188 = vmatprep.subr.bf16.mxu0 0
    %1189 = vmatpush1.bf16.msra.mxu0 0
    %1190 = vmatprep.subr.bf16.mxu0 0
    %1191 = vmatpush1.bf16.msra.mxu0 0
    %1192 = vmatprep.subr.bf16.mxu0 0
    %1193 = vmatpush1.bf16.msra.mxu0 0
    %1194 = vmatprep.subr.bf16.mxu0 0
    %1195 = vmatpush1.bf16.msra.mxu0 0
    %1196 = vmatprep.subr.bf16.mxu0 0
    %1197 = vmatpush1.bf16.msra.mxu0 0
    %1198 = vmatprep.subr.bf16.mxu0 0
    %1199 = vmatpush1.bf16.msra.mxu0 0
    %1200 = vmatprep.subr.bf16.mxu0 0
    %1201 = vmatpush1.bf16.msra.mxu0 0
    %1202 = vmatprep.subr.bf16.mxu0 0
    %1203 = vmatpush1.bf16.msra.mxu0 0
    %1204 = vmatprep.subr.bf16.mxu0 0
    %1205 = vmatpush1.bf16.msra.mxu0 0
    %1206 = vmatprep.mubr.bf16.mxu0 0
    %1207 = vmatmul.mubr.bf16.gmra.mrb[0].mxu0 %v1172
    %v1208 = vpop.f32.mrb[0].mxu0
    %v1209 = vadd.f32 %v1158, %v1208
    %v1210 = vpop.f32.mrb[0].mxu0
    %v1211 = vpop.f32.mrb[0].mxu0
    %v1212 = vadd.f32 %v1158, %v1211
    %v1213 = vpop.f32.mrb[0].mxu0
    %1214 = vdwg.mxu0
    %v1215 = vmul.f32 %v1209, 0.5
    %v1216 = vmul.f32 %v1212, 0.5
    %v1217 = vmul.f32 %v1209, 0.70710677
    %v1218 = vmul.f32 %v1212, 0.70710677
    %vm1219 = vcmp.ge.f32.partialorder %v1217, 0.0
    %vm1220 = vcmp.ge.f32.partialorder %v1218, 0.0
    %v1221 = vsel %vm1219, 1.0, -1.0
    %v1222 = vsel %vm1220, 1.0, -1.0
    %v1223 = vand.u32 2147483647, %v1217
    %v1224 = vand.u32 2147483647, %v1218
    %v1225 = vmul.f32 %v1223, 0.3275911
    %v1226 = vmul.f32 %v1224, 0.3275911
    %v1227 = vadd.f32 %v1225, 1.0
    %v1228 = vadd.f32 %v1226, 1.0
    %v1229 = vrcp.pop %v1227
    %v1230 = vmul.f32 1.0, %v1229
    %v1231 = vrcp.pop %v1228
    %v1232 = vmul.f32 1.0, %v1231
    %v1233 = vmul.f32 %v1230, 1.0614054
    %v1234 = vmul.f32 %v1232, 1.0614054
    %v1235 = vadd.f32 %v1233, -1.4531521
    %v1236 = vadd.f32 %v1234, -1.4531521
    %v1237 = vmul.f32 %v1235, %v1230
    %v1238 = vmul.f32 %v1236, %v1232
    %v1239 = vadd.f32 %v1237, 1.4214138
    %v1240 = vadd.f32 %v1238, 1.4214138
    %v1241 = vmul.f32 %v1239, %v1230
    %v1242 = vmul.f32 %v1240, %v1232
    %v1243 = vadd.f32 %v1241, -0.28449672
    %v1244 = vadd.f32 %v1242, -0.28449672
    %v1245 = vmul.f32 %v1243, %v1230
    %v1246 = vmul.f32 %v1244, %v1232
    %v1247 = vadd.f32 %v1245, 0.2548296
    %v1248 = vadd.f32 %v1246, 0.2548296
    %v1249 = vmul.f32 %v1247, %v1230
    %v1250 = vmul.f32 %v1248, %v1232
    %v1251 = vsub.f32 0.0, %v1223
    %v1252 = vsub.f32 0.0, %v1224
    %v1253 = vmul.f32 %v1251, %v1223
    %v1254 = vmul.f32 %v1252, %v1224
    %v1255 = vmul.f32 %v1253, 1.442695
    %v1256 = vpow.pop %v1255
    %v1257 = vmul.f32 %v1254, 1.442695
    %v1258 = vpow.pop %v1257
    %v1259 = vmul.f32 %v1249, %v1256
    %v1260 = vmul.f32 %v1250, %v1258
    %v1261 = vsub.f32 1.0, %v1259
    %v1262 = vsub.f32 1.0, %v1260
    %v1263 = vmul.f32 %v1221, %v1261
    %v1264 = vmul.f32 %v1222, %v1262
    %v1265 = vadd.f32 %v1263, 1.0
    %v1266 = vadd.f32 %v1264, 1.0
    %v1267 = vmul.f32 %v1215, %v1265
    %v1268 = vmul.f32 %v1216, %v1266
    %v1269 = vpack.c.bf16 %v1268, %v1267
    %v1270 = vld [vmem:[%s5] sm:$0xf]
    %v1271 = vld [vmem:[%s5 + $0x4] sm:$0xf]
    %v1272 = vld [vmem:[%s5 + $0x8] sm:$0xf]
    %v1273 = vld [vmem:[%s5 + $0xc] sm:$0xf]
    %v1274 = vld [vmem:[%s5 + $0x10] sm:$0xf]
    %v1275 = vld [vmem:[%s5 + $0x14] sm:$0xf]
    %v1276 = vld [vmem:[%s5 + $0x18] sm:$0xf]
    %v1277 = vld [vmem:[%s5 + $0x1c] sm:$0xf]
    %v1278 = vld [vmem:[%s5 + $0x20] sm:$0xf]
    %v1279 = vld [vmem:[%s5 + $0x24] sm:$0xf]
    %v1280 = vld [vmem:[%s5 + $0x28] sm:$0xf]
    %v1281 = vld [vmem:[%s5 + $0x2c] sm:$0xf]
    %v1282 = vld [vmem:[%s5 + $0x30] sm:$0xf]
    %v1283 = vld [vmem:[%s5 + $0x34] sm:$0xf]
    %v1284 = vld [vmem:[%s5 + $0x38] sm:$0xf]
    %v1285 = vld [vmem:[%s5 + $0x3c] sm:$0xf]
    %v1286 = vlaneseq
    %v1287 = vshrl.u32 %v1286, 7
    %v1288 = vsub.s32 6, %v1287
    %v1289 = vrot.slane %v27, %v1288
    %v1306 = vunpack.c.l.b16 %v1270
    %v1307 = vunpack.c.l.b16 %v1271
    %v1308 = vunpack.c.l.b16 %v1272
    %v1309 = vunpack.c.l.b16 %v1273
    %v1310 = vunpack.c.l.b16 %v1274
    %v1311 = vunpack.c.l.b16 %v1275
    %v1312 = vunpack.c.l.b16 %v1276
    %v1313 = vunpack.c.l.b16 %v1277
    %v1314 = vunpack.c.l.b16 %v1278
    %v1315 = vunpack.c.l.b16 %v1279
    %v1316 = vunpack.c.l.b16 %v1280
    %v1317 = vunpack.c.l.b16 %v1281
    %v1318 = vunpack.c.l.b16 %v1282
    %v1319 = vunpack.c.l.b16 %v1283
    %v1320 = vunpack.c.l.b16 %v1284
    %v1321 = vunpack.c.l.b16 %v1285
    %v1322 = vpack.c.b16 %v1307, %v1306
    %v1323 = vpack.c.b16 %v1309, %v1308
    %v1324 = vpack.c.b16 %v1311, %v1310
    %v1325 = vpack.c.b16 %v1313, %v1312
    %v1326 = vpack.c.b16 %v1315, %v1314
    %v1327 = vpack.c.b16 %v1317, %v1316
    %v1328 = vpack.c.b16 %v1319, %v1318
    %v1329 = vpack.c.b16 %v1321, %v1320
    %1338 = vmatprep.subr.bf16.mxu0 0
    %1339 = vmatpush1.bf16.msra.mxu0 %v1322
    %1340 = vmatprep.subr.bf16.mxu0 0
    %1341 = vmatpush1.bf16.msra.mxu0 %v1323
    %1342 = vmatprep.subr.bf16.mxu0 0
    %1343 = vmatpush1.bf16.msra.mxu0 %v1324
    %1344 = vmatprep.subr.bf16.mxu0 0
    %1345 = vmatpush1.bf16.msra.mxu0 %v1325
    %1346 = vmatprep.subr.bf16.mxu0 0
    %1347 = vmatpush1.bf16.msra.mxu0 %v1326
    %1348 = vmatprep.subr.bf16.mxu0 0
    %1349 = vmatpush1.bf16.msra.mxu0 %v1327
    %1350 = vmatprep.subr.bf16.mxu0 0
    %1351 = vmatpush1.bf16.msra.mxu0 %v1328
    %1352 = vmatprep.subr.bf16.mxu0 0
    %1353 = vmatpush1.bf16.msra.mxu0 %v1329
    %1354 = vmatprep.subr.bf16.mxu0 0
    %1355 = vmatpush1.bf16.msra.mxu0 0
    %1356 = vmatprep.subr.bf16.mxu0 0
    %1357 = vmatpush1.bf16.msra.mxu0 0
    %1358 = vmatprep.subr.bf16.mxu0 0
    %1359 = vmatpush1.bf16.msra.mxu0 0
    %1360 = vmatprep.subr.bf16.mxu0 0
    %1361 = vmatpush1.bf16.msra.mxu0 0
    %1362 = vmatprep.subr.bf16.mxu0 0
    %1363 = vmatpush1.bf16.msra.mxu0 0
    %1364 = vmatprep.subr.bf16.mxu0 0
    %1365 = vmatpush1.bf16.msra.mxu0 0
    %1366 = vmatprep.subr.bf16.mxu0 0
    %1367 = vmatpush1.bf16.msra.mxu0 0
    %1368 = vmatprep.subr.bf16.mxu0 0
    %1369 = vmatpush1.bf16.msra.mxu0 0
    %1370 = vmatprep.mubr.bf16.mxu0 0
    %1371 = vmatmul.mubr.bf16.gmra.mrb[0].mxu0 %v1269
    %v1372 = vpop.f32.mrb[0].mxu0
    %v1373 = vadd.f32 %v1289, %v1372
    %v1374 = vpop.f32.mrb[0].mxu0
    %v1375 = vpop.f32.mrb[0].mxu0
    %v1376 = vadd.f32 %v1289, %v1375
    %v1377 = vpop.f32.mrb[0].mxu0
    %1378 = vdwg.mxu0
    %v1379 = vadd.f32 %v1110, %v1373
    %v1380 = vadd.f32 %v1111, %v1376
    %1381 = vst.msk [vmem:[#allocation2] sm:$0xff] %vm28, %v1379
    %1382 = vst.msk [vmem:[#allocation2 + $0x8] sm:$0xff] %vm28, %v1380
    // Predicated region
    $region26: #{vit_block.1} parent=1 // pred_check
      _
    $region27: #{vit_block.1} parent=1 // pred_check_branch
      %1384 = sbr.rel (0) target = $region29
    $region28: #{vit_block.1} parent=1 // pred_region
      %s1386 = ssub.s32 256, 256
      %1387 = vsyncadd [#allocation3], %s1386
      %s1388 = sshll.u32 [#allocation2], 4
      %s1389 = int_to_ptr.vmem [resolvable:$true] %s1388
      %1394 = dma.vmem_to_hbm [thread:$0]  %s1389, 256, %s6, [#allocation3], 128, 128, 8
    $region29: #{vit_block.1} parent=1 // pred_fallthru
      _
    // Predicated region
    $region30: #{vit_block.1} parent=1 // pred_check
      _
    $region31: #{vit_block.1} parent=1 // pred_check_branch
      %1396 = sbr.rel (0) target = $region33
    $region32: #{vit_block.1} parent=1 // pred_region
      %1397 = dma.done [#allocation3], 256
    $region33: #{vit_block.1} parent=1 // pred_fallthru
      _
    %1398 = vsyncpa [#allocation3], 1

</llo_original>
